<compile_context>
chip_gen: v7x
topology: tpu7x:2x2x1
jax: 0.10.0
libtpu: 0.0.40
codegen_flags: <defaults>
</compile_context>

<pallas_src>
import functools

import jax
import jax.numpy as jnp
from jax import lax
from jax.experimental import pallas as pl
from jax.experimental.pallas import tpu as pltpu

EPSILON = float(jnp.finfo(jnp.float32).eps)   # torch.finfo(torch.float32).eps
LN_EPS = 1e-5                                 # torch.nn.LayerNorm default eps
NB = 8                                        # batch tile (sublane aligned)


def _round_up(x, m):
    return (x + m - 1) // m * m


def _const(shape):
    n = len(shape)
    return pl.BlockSpec(shape, lambda i, _n=n: (0,) * _n)


# ----------------------------- Pallas kernels ------------------------------

def embed_kernel(f_ref, w_ref, b_ref, g_ref, beta_ref, o_ref):
    """Time-axis normalization + Linear + LayerNorm + ReLU for one batch tile.

    f_ref : (T, NB, F) time-major input tile
    o_ref : (T, NB, H) time-major output tile
    """
    T, nb, F = f_ref.shape
    x = f_ref[...]
    # per-(batch, freq) normalization over time (torch.std -> unbiased, /(T-1))
    mean = jnp.mean(x, axis=0, keepdims=True)
    diff = x - mean
    var = jnp.sum(diff * diff, axis=0, keepdims=True) / max(T - 1, 1)
    xn = diff / (jnp.sqrt(var) + EPSILON)
    # Linear (bf16 operands, f32 accumulation on the MXU)
    h = jnp.dot(xn.reshape(T * nb, F).astype(jnp.bfloat16), w_ref[...],
                preferred_element_type=jnp.float32) + b_ref[...]
    # LayerNorm + ReLU
    mu = jnp.mean(h, axis=-1, keepdims=True)
    v = jnp.mean((h - mu) ** 2, axis=-1, keepdims=True)
    h = (h - mu) * lax.rsqrt(v + LN_EPS) * g_ref[...] + beta_ref[...]
    o_ref[...] = jnp.maximum(h, 0.0).reshape(T, nb, -1)


def blstm_layer_kernel(x_ref, wih_ref, whf_ref, whb_ref, b_ref, g_ref, beta_ref,
                       o_ref, xg_ref):
    """Bidirectional LSTM layer + LayerNorm on a time-major (T, NB, H) tile.

    wih_ref : (H, 8*Hc)  = [W_ih_fwd^T | W_ih_bwd^T]   (PyTorch gate order i,f,g,o)
    whf/whb : (Hc, 4*Hc) = W_hh^T per direction
    b_ref   : (1, 8*Hc)  = (b_ih + b_hh) per direction, concatenated
    """
    T, nb, H = x_ref.shape
    Hc = H // 2
    G = 4 * Hc
    cdt = jnp.bfloat16

    # 1) Input projections for BOTH directions in a single big MXU matmul.
    x2 = x_ref[...].reshape(T * nb, H).astype(cdt)
    xg_ref[...] = (jnp.dot(x2, wih_ref[...], preferred_element_type=jnp.float32)
                   + b_ref[...]).reshape(T, nb, 2 * G)

    whf = whf_ref[...]
    whb = whb_ref[...]

    def cell(gates, c):
        i = jax.nn.sigmoid(gates[:, 0:Hc])
        f = jax.nn.sigmoid(gates[:, Hc:2 * Hc])
        g = jnp.tanh(gates[:, 2 * Hc:3 * Hc])
        o = jax.nn.sigmoid(gates[:, 3 * Hc:4 * Hc])
        c = f * c + i * g
        return o * jnp.tanh(c), c

    # 2) Forward and backward recurrences interleaved in ONE loop: the two
    #    directions are independent within a step, so every iteration exposes
    #    2x ILP.  Each direction writes directly into its lane-half of o_ref.
    def step(s, carry):
        hf, cf, hb, cb = carry
        tb = T - 1 - s
        gh_f = jnp.dot(hf.astype(cdt), whf, preferred_element_type=jnp.float32)
        gh_b = jnp.dot(hb.astype(cdt), whb, preferred_element_type=jnp.float32)
        gf = xg_ref[s, :, :G] + gh_f
        gb = xg_ref[tb, :, G:] + gh_b
        hf, cf = cell(gf, cf)
        hb, cb = cell(gb, cb)
        o_ref[s, :, :Hc] = hf
        o_ref[tb, :, Hc:] = hb
        return hf, cf, hb, cb

    z = jnp.zeros((nb, Hc), jnp.float32)
    lax.fori_loop(0, T, step, (z, z, z, z))

    # 3) LayerNorm over H on the concatenated (fwd | bwd) sequence held in o_ref.
    y = o_ref[...]
    mu = jnp.mean(y, axis=-1, keepdims=True)
    v = jnp.mean((y - mu) ** 2, axis=-1, keepdims=True)
    o_ref[...] = (y - mu) * lax.rsqrt(v + LN_EPS) * g_ref[...] + beta_ref[...]


def mask_output_kernel(x_ref, f_ref, w_ref, b_ref, m_ref, y_ref, *, num_bins, n_y):
    """Final Linear + ReLU, chunk into masks, mask * f_orig, stack — fused.

    x_ref : (NB, T, H) encoder output tile (batch-major)
    f_ref : (NB, T, F) original (un-normalized) features
    m_ref : (NB, T, O_pad) relu masks (lane-padded output slab)
    y_ref : (NB, n_y, T, F) y_pred tile (torch stacks masks[:-1])
    """
    nb, T, H = x_ref.shape
    x2 = x_ref[...].reshape(nb * T, H)
    m = jnp.dot(x2.astype(jnp.bfloat16), w_ref[...],
                preferred_element_type=jnp.float32) + b_ref[...]
    m = jnp.maximum(m, 0.0).reshape(nb, T, -1)
    m_ref[...] = m
    f = f_ref[...]
    for k in range(n_y):                       # static unroll
        y_ref[:, k, :, :] = m[:, :, k * num_bins:(k + 1) * num_bins] * f


# ------------------------------ wrappers -----------------------------------

def embed(f_tm, p):
    T, Np, F = f_tm.shape
    H = p['W'].shape[1]
    return pl.pallas_call(
        embed_kernel,
        grid=(Np // NB,),
        in_specs=[pl.BlockSpec((T, NB, F), lambda i: (0, i, 0)),
                  _const((F, H)), _const((1, H)), _const((1, H)), _const((1, H))],
        out_specs=pl.BlockSpec((T, NB, H), lambda i: (0, i, 0)),
        out_shape=jax.ShapeDtypeStruct((T, Np, H), jnp.float32),
        compiler_params=pltpu.CompilerParams(dimension_semantics=("parallel",)),
    )(f_tm, p['W'].astype(jnp.bfloat16), p['b'], p['ln_g'], p['ln_b'])


def blstm_layer(x_tm, p):
    T, Np, H = x_tm.shape
    Hc = H // 2
    return pl.pallas_call(
        blstm_layer_kernel,
        grid=(Np // NB,),
        in_specs=[pl.BlockSpec((T, NB, H), lambda i: (0, i, 0)),
                  _const((H, 8 * Hc)),
                  _const((Hc, 4 * Hc)), _const((Hc, 4 * Hc)),
                  _const((1, 8 * Hc)),
                  _const((1, H)), _const((1, H))],
        out_specs=pl.BlockSpec((T, NB, H), lambda i: (0, i, 0)),
        out_shape=jax.ShapeDtypeStruct((T, Np, H), jnp.float32),
        scratch_shapes=[pltpu.VMEM((T, NB, 8 * Hc), jnp.float32)],
        compiler_params=pltpu.CompilerParams(
            dimension_semantics=("parallel",),
            vmem_limit_bytes=64 * 1024 * 1024),
    )(x_tm,
      p['w_ih'].astype(jnp.bfloat16),
      p['w_hh_f'].astype(jnp.bfloat16),
      p['w_hh_b'].astype(jnp.bfloat16),
      p['b'], p['ln_g'], p['ln_b'])


def mask_output(x_bm, f_pad, p, *, num_bins, n_y):
    Np, T, H = x_bm.shape
    F = f_pad.shape[-1]
    O = p['W'].shape[1]
    O_pad = _round_up(O, 128)   # lane-dense output slab; padding sliced off outside
    W = jnp.pad(p['W'], ((0, 0), (0, O_pad - O))).astype(jnp.bfloat16)
    b = jnp.pad(p['b'], ((0, 0), (0, O_pad - O)))
    kern = functools.partial(mask_output_kernel, num_bins=num_bins, n_y=n_y)
    masks, y_pred = pl.pallas_call(
        kern,
        grid=(Np // NB,),
        in_specs=[pl.BlockSpec((NB, T, H), lambda i: (i, 0, 0)),
                  pl.BlockSpec((NB, T, F), lambda i: (i, 0, 0)),
                  _const((H, O_pad)), _const((1, O_pad))],
        out_specs=[pl.BlockSpec((NB, T, O_pad), lambda i: (i, 0, 0)),
                   pl.BlockSpec((NB, n_y, T, F), lambda i: (i, 0, 0, 0))],
        out_shape=[jax.ShapeDtypeStruct((Np, T, O_pad), jnp.float32),
                   jax.ShapeDtypeStruct((Np, n_y, T, F), jnp.float32)],
        compiler_params=pltpu.CompilerParams(dimension_semantics=("parallel",)),
    )(x_bm, f_pad, W, b)
    return masks[:, :, :O], y_pred


def blstm_forward(f, params, *, num_bins, num_spk, num_noise):
    """Reproduces BLSTM.forward: returns (y_pred, masks)."""
    if f.ndim == 4:
        f = jnp.squeeze(f, axis=0)
    N, T, F = f.shape
    n_out = num_spk + num_noise
    n_y = n_out - 1                       # torch stacks masks[:-1]

    # Sublane-align the batch once; padded rows are dropped at the end.
    Np = _round_up(N, NB)
    f_pad = jnp.pad(f, ((0, Np - N), (0, 0), (0, 0)))
    f_tm = jnp.transpose(f_pad, (1, 0, 2))            # time-major (T, Np, F)

    x = embed(f_tm, params['embed'])                  # (T, Np, H) time-major
    for lp in params['layers']:
        x = blstm_layer(x, lp)
    x_bm = jnp.transpose(x, (1, 0, 2))                # (Np, T, H) batch-major

    masks_full, y_pred = mask_output(x_bm, f_pad, params['out'],
                                     num_bins=num_bins, n_y=n_y)
    masks_full = masks_full[:N]
    y_pred = y_pred[:N]
    masks = tuple(masks_full[..., k * num_bins:(k + 1) * num_bins]
                  for k in range(n_out))
    return y_pred, masks


# ------------------------------ parameters ---------------------------------

def init_params(key, idim, hidden_dim, num_layers, num_bins, num_spk, num_noise):
    Hc = hidden_dim // 2
    keys = iter(jax.random.split(key, 2 + 4 * num_layers + 2))

    def nrm(shape, scale=0.1):
        return scale * jax.random.normal(next(keys), shape, dtype=jnp.float32)

    params = {
        'embed': {
            'W': nrm((idim, hidden_dim)),                       # Linear weight^T
            'b': nrm((1, hidden_dim)),
            'ln_g': jnp.ones((1, hidden_dim), jnp.float32),
            'ln_b': jnp.zeros((1, hidden_dim), jnp.float32),
        },
        'layers': [],
    }
    for _ in range(num_layers):
        params['layers'].append({
            'w_ih': nrm((hidden_dim, 8 * Hc)),   # [W_ih_fwd^T | W_ih_bwd^T]
            'b': nrm((1, 8 * Hc)),               # (b_ih + b_hh) per direction
            'w_hh_f': nrm((Hc, 4 * Hc)),         # W_hh_fwd^T
            'w_hh_b': nrm((Hc, 4 * Hc)),         # W_hh_bwd^T
            'ln_g': jnp.ones((1, hidden_dim), jnp.float32),
            'ln_b': jnp.zeros((1, hidden_dim), jnp.float32),
        })
    n_out = num_bins * (num_spk + num_noise)
    params['out'] = {'W': nrm((hidden_dim, n_out)), 'b': nrm((1, n_out))}
    return params


# --------------------------------- main -------------------------------------

if __name__ == "__main__":
    # Small shapes consistent with the module (idim == num_bins so mask * f_orig works).
    N, T, Fdim = 2, 8, 16
    hidden_dim, num_layers = 32, 2
    num_bins, num_spk, num_noise = Fdim, 2, 1

    key = jax.random.PRNGKey(0)
    kx, kp = jax.random.split(key)
    f = jax.random.normal(kx, (N, T, Fdim), dtype=jnp.float32)   # N x T x F
    params = init_params(kp, Fdim, hidden_dim, num_layers, num_bins, num_spk, num_noise)

    fwd = jax.jit(functools.partial(blstm_forward,
                                    num_bins=num_bins,
                                    num_spk=num_spk,
                                    num_noise=num_noise))
    y_pred, masks = fwd(f, params)
    jax.block_until_ready(y_pred)
    jax.block_until_ready(masks)

    assert y_pred.shape == (N, num_spk, T, Fdim), y_pred.shape
    assert len(masks) == num_spk + num_noise
    assert all(m.shape == (N, T, num_bins) for m in masks)
    assert bool(jnp.all(jnp.isfinite(y_pred)))
    assert all(bool(jnp.all(jnp.isfinite(m))) for m in masks)

    print("KERNEL_OK")
</pallas_src>

<mosaic_0001>
module attributes {stable_mosaic.version = 11 : i64} {
  func.func @mask_output_kernel(%arg0: i32, %arg1: memref<8x8x32xf32, #tpu.memory_space<vmem>>, %arg2: memref<8x8x16xf32, #tpu.memory_space<vmem>>, %arg3: memref<32x128xbf16, #tpu.memory_space<vmem>>, %arg4: memref<1x128xf32, #tpu.memory_space<vmem>>, %arg5: memref<8x8x128xf32, #tpu.memory_space<vmem>>, %arg6: memref<8x2x8x16xf32, #tpu.memory_space<vmem>>) attributes {dimension_semantics = [#tpu.dimension_semantics<parallel>], iteration_bounds = array<i64: 1>, scalar_prefetch = 0 : i64, scratch_operands = 0 : i64, tpu.core_type = #tpu.core_type<tc>, window_params = [{transform_indices = @transform_0, window_bounds = array<i64: 8, 8, 32>}, {transform_indices = @transform_1, window_bounds = array<i64: 8, 8, 16>}, {pipeline_mode = #tpu.pipeline_mode<synchronous>, transform_indices = @transform_2, window_bounds = array<i64: 32, 128>}, {pipeline_mode = #tpu.pipeline_mode<synchronous>, transform_indices = @transform_3, window_bounds = array<i64: 1, 128>}, {transform_indices = @transform_4, window_bounds = array<i64: 8, 8, 128>}, {transform_indices = @transform_5, window_bounds = array<i64: 8, 2, 8, 16>}]} {
    %c0 = arith.constant 0 : index
    %c0_0 = arith.constant 0 : index
    %c0_1 = arith.constant 0 : index
    %0 = vector.load %arg1[%c0, %c0_0, %c0_1] : memref<8x8x32xf32, #tpu.memory_space<vmem>>, vector<8x8x32xf32>
    %1 = vector.shape_cast %0 : vector<8x8x32xf32> to vector<64x32xf32>
    %2 = arith.truncf %1 : vector<64x32xf32> to vector<64x32xbf16>
    %c0_2 = arith.constant 0 : index
    %c0_3 = arith.constant 0 : index
    %3 = vector.load %arg3[%c0_2, %c0_3] : memref<32x128xbf16, #tpu.memory_space<vmem>>, vector<32x128xbf16>
    %cst = arith.constant dense<0.000000e+00> : vector<64x128xf32>
    %4 = tpu.matmul %2, %3, %cst {dimension_numbers = #tpu.dot_dimension_numbers<[1], [0], [0], [1], [0, 0, 1, 1], [], []>} : vector<64x32xbf16>, vector<32x128xbf16>, vector<64x128xf32> -> vector<64x128xf32>
    %c0_4 = arith.constant 0 : index
    %c0_5 = arith.constant 0 : index
    %5 = vector.load %arg4[%c0_4, %c0_5] : memref<1x128xf32, #tpu.memory_space<vmem>>, vector<1x128xf32>
    %6 = vector.broadcast %5 : vector<1x128xf32> to vector<64x128xf32>
    %7 = arith.addf %4, %6 : vector<64x128xf32>
    %cst_6 = arith.constant 0.000000e+00 : f32
    %8 = vector.broadcast %cst_6 : f32 to vector<64x128xf32>
    %9 = arith.maximumf %7, %8 : vector<64x128xf32>
    %10 = vector.shape_cast %9 : vector<64x128xf32> to vector<8x8x128xf32>
    %c0_7 = arith.constant 0 : index
    %c0_8 = arith.constant 0 : index
    %c0_9 = arith.constant 0 : index
    %11 = vector.load %arg5[%c0_7, %c0_8, %c0_9] : memref<8x8x128xf32, #tpu.memory_space<vmem>>, vector<8x8x128xf32>
    tpu.vector_store %arg5[%c0_7, %c0_8, %c0_9], %10 {strides = array<i32>} : memref<8x8x128xf32, #tpu.memory_space<vmem>>, vector<8x8x128xf32>,
    %c0_10 = arith.constant 0 : index
    %c0_11 = arith.constant 0 : index
    %c0_12 = arith.constant 0 : index
    %12 = vector.load %arg2[%c0_10, %c0_11, %c0_12] : memref<8x8x16xf32, #tpu.memory_space<vmem>>, vector<8x8x16xf32>
    %13 = vector.extract_strided_slice %10 {offsets = [0, 0, 0], sizes = [8, 8, 16], strides = [1, 1, 1]} : vector<8x8x128xf32> to vector<8x8x16xf32>
    %14 = arith.mulf %13, %12 : vector<8x8x16xf32>
    %c0_13 = arith.constant 0 : index
    %c0_14 = arith.constant 0 : index
    %c0_15 = arith.constant 0 : index
    %c0_16 = arith.constant 0 : index
    %15 = vector.load %arg6[%c0_13, %c0_14, %c0_15, %c0_16] : memref<8x2x8x16xf32, #tpu.memory_space<vmem>>, vector<8x1x8x16xf32>
    %16 = vector.shape_cast %15 : vector<8x1x8x16xf32> to vector<8x8x16xf32>
    %17 = vector.shape_cast %14 : vector<8x8x16xf32> to vector<8x1x8x16xf32>
    tpu.vector_store %arg6[%c0_13, %c0_14, %c0_15, %c0_16], %17 {strides = array<i32>} : memref<8x2x8x16xf32, #tpu.memory_space<vmem>>, vector<8x1x8x16xf32>,
    %18 = vector.extract_strided_slice %10 {offsets = [0, 0, 16], sizes = [8, 8, 16], strides = [1, 1, 1]} : vector<8x8x128xf32> to vector<8x8x16xf32>
    %19 = arith.mulf %18, %12 : vector<8x8x16xf32>
    %c0_17 = arith.constant 0 : index
    %c1 = arith.constant 1 : index
    %c0_18 = arith.constant 0 : index
    %c0_19 = arith.constant 0 : index
    %20 = vector.load %arg6[%c0_17, %c1, %c0_18, %c0_19] : memref<8x2x8x16xf32, #tpu.memory_space<vmem>>, vector<8x1x8x16xf32>
    %21 = vector.shape_cast %20 : vector<8x1x8x16xf32> to vector<8x8x16xf32>
    %22 = vector.shape_cast %19 : vector<8x8x16xf32> to vector<8x1x8x16xf32>
    tpu.vector_store %arg6[%c0_17, %c1, %c0_18, %c0_19], %22 {strides = array<i32>} : memref<8x2x8x16xf32, #tpu.memory_space<vmem>>, vector<8x1x8x16xf32>,
    return
  }
  func.func @transform_0(%arg0: i32) -> (i32, i32, i32) {
    %c0_i32 = arith.constant 0 : i32
    %c0_i32_0 = arith.constant 0 : i32
    %c0_i32_1 = arith.constant 0 : i32
    return %arg0, %c0_i32, %c0_i32_0 : i32, i32, i32
  }
  func.func @transform_1(%arg0: i32) -> (i32, i32, i32) {
    %c0_i32 = arith.constant 0 : i32
    %c0_i32_0 = arith.constant 0 : i32
    %c0_i32_1 = arith.constant 0 : i32
    return %arg0, %c0_i32, %c0_i32_0 : i32, i32, i32
  }
  func.func @transform_2(%arg0: i32) -> (i32, i32) {
    %c0_i32 = arith.constant 0 : i32
    %c0_i32_0 = arith.constant 0 : i32
    %c0_i32_1 = arith.constant 0 : i32
    return %c0_i32, %c0_i32_0 : i32, i32
  }
  func.func @transform_3(%arg0: i32) -> (i32, i32) {
    %c0_i32 = arith.constant 0 : i32
    %c0_i32_0 = arith.constant 0 : i32
    %c0_i32_1 = arith.constant 0 : i32
    return %c0_i32, %c0_i32_0 : i32, i32
  }
  func.func @transform_4(%arg0: i32) -> (i32, i32, i32) {
    %c0_i32 = arith.constant 0 : i32
    %c0_i32_0 = arith.constant 0 : i32
    %c0_i32_1 = arith.constant 0 : i32
    return %arg0, %c0_i32, %c0_i32_0 : i32, i32, i32
  }
  func.func @transform_5(%arg0: i32) -> (i32, i32, i32, i32) {
    %c0_i32 = arith.constant 0 : i32
    %c0_i32_0 = arith.constant 0 : i32
    %c0_i32_1 = arith.constant 0 : i32
    %c0_i32_2 = arith.constant 0 : i32
    return %arg0, %c0_i32, %c0_i32_0, %c0_i32_1 : i32, i32, i32, i32
  }
}

module attributes {stable_mosaic.version = 11 : i64} {
  func.func @embed_kernel(%arg0: i32, %arg1: memref<8x8x16xf32, #tpu.memory_space<vmem>>, %arg2: memref<16x32xbf16, #tpu.memory_space<vmem>>, %arg3: memref<1x32xf32, #tpu.memory_space<vmem>>, %arg4: memref<1x32xf32, #tpu.memory_space<vmem>>, %arg5: memref<1x32xf32, #tpu.memory_space<vmem>>, %arg6: memref<8x8x32xf32, #tpu.memory_space<vmem>>) attributes {dimension_semantics = [#tpu.dimension_semantics<parallel>], iteration_bounds = array<i64: 1>, scalar_prefetch = 0 : i64, scratch_operands = 0 : i64, tpu.core_type = #tpu.core_type<tc>, window_params = [{transform_indices = @transform_0, window_bounds = array<i64: 8, 8, 16>}, {pipeline_mode = #tpu.pipeline_mode<synchronous>, transform_indices = @transform_1, window_bounds = array<i64: 16, 32>}, {pipeline_mode = #tpu.pipeline_mode<synchronous>, transform_indices = @transform_2, window_bounds = array<i64: 1, 32>}, {pipeline_mode = #tpu.pipeline_mode<synchronous>, transform_indices = @transform_3, window_bounds = array<i64: 1, 32>}, {pipeline_mode = #tpu.pipeline_mode<synchronous>, transform_indices = @transform_4, window_bounds = array<i64: 1, 32>}, {transform_indices = @transform_5, window_bounds = array<i64: 8, 8, 32>}]} {
    %c0 = arith.constant 0 : index
    %c0_0 = arith.constant 0 : index
    %c0_1 = arith.constant 0 : index
    %0 = vector.load %arg1[%c0, %c0_0, %c0_1] : memref<8x8x16xf32, #tpu.memory_space<vmem>>, vector<8x8x16xf32>
    %cst = arith.constant dense<0.000000e+00> : vector<8x16xf32>
    %1 = vector.multi_reduction <add>, %0, %cst [0] : vector<8x8x16xf32> to vector<8x16xf32>
    %2 = vector.shape_cast %1 : vector<8x16xf32> to vector<1x8x16xf32>
    %cst_2 = arith.constant 8.000000e+00 : f32
    %3 = vector.broadcast %cst_2 : f32 to vector<1x8x16xf32>
    %4 = arith.divf %2, %3 : vector<1x8x16xf32>
    %5 = vector.broadcast %4 : vector<1x8x16xf32> to vector<8x8x16xf32>
    %6 = arith.subf %0, %5 : vector<8x8x16xf32>
    %7 = arith.mulf %6, %6 : vector<8x8x16xf32>
    %cst_3 = arith.constant dense<0.000000e+00> : vector<8x16xf32>
    %8 = vector.multi_reduction <add>, %7, %cst_3 [0] : vector<8x8x16xf32> to vector<8x16xf32>
    %9 = vector.shape_cast %8 : vector<8x16xf32> to vector<1x8x16xf32>
    %cst_4 = arith.constant 7.000000e+00 : f32
    %10 = vector.broadcast %cst_4 : f32 to vector<1x8x16xf32>
    %11 = arith.divf %9, %10 : vector<1x8x16xf32>
    %12 = math.sqrt %11 : vector<1x8x16xf32>
    %cst_5 = arith.constant 1.1920929E-7 : f32
    %13 = vector.broadcast %cst_5 : f32 to vector<1x8x16xf32>
    %14 = arith.addf %12, %13 : vector<1x8x16xf32>
    %15 = vector.broadcast %14 : vector<1x8x16xf32> to vector<8x8x16xf32>
    %16 = arith.divf %6, %15 : vector<8x8x16xf32>
    %17 = vector.shape_cast %16 : vector<8x8x16xf32> to vector<64x16xf32>
    %18 = arith.truncf %17 : vector<64x16xf32> to vector<64x16xbf16>
    %c0_6 = arith.constant 0 : index
    %c0_7 = arith.constant 0 : index
    %19 = vector.load %arg2[%c0_6, %c0_7] : memref<16x32xbf16, #tpu.memory_space<vmem>>, vector<16x32xbf16>
    %cst_8 = arith.constant dense<0.000000e+00> : vector<64x32xf32>
    %20 = tpu.matmul %18, %19, %cst_8 {dimension_numbers = #tpu.dot_dimension_numbers<[1], [0], [0], [1], [0, 0, 1, 1], [], []>} : vector<64x16xbf16>, vector<16x32xbf16>, vector<64x32xf32> -> vector<64x32xf32>
    %c0_9 = arith.constant 0 : index
    %c0_10 = arith.constant 0 : index
    %21 = vector.load %arg3[%c0_9, %c0_10] : memref<1x32xf32, #tpu.memory_space<vmem>>, vector<1x32xf32>
    %22 = vector.broadcast %21 : vector<1x32xf32> to vector<64x32xf32>
    %23 = arith.addf %20, %22 : vector<64x32xf32>
    %cst_11 = arith.constant dense<0.000000e+00> : vector<64xf32>
    %24 = vector.multi_reduction <add>, %23, %cst_11 [1] : vector<64x32xf32> to vector<64xf32>
    %25 = vector.shape_cast %24 : vector<64xf32> to vector<64x1xf32>
    %cst_12 = arith.constant 3.200000e+01 : f32
    %26 = vector.broadcast %cst_12 : f32 to vector<64x1xf32>
    %27 = arith.divf %25, %26 : vector<64x1xf32>
    %28 = vector.broadcast %27 : vector<64x1xf32> to vector<64x32xf32>
    %29 = arith.subf %23, %28 : vector<64x32xf32>
    %30 = arith.mulf %29, %29 : vector<64x32xf32>
    %cst_13 = arith.constant dense<0.000000e+00> : vector<64xf32>
    %31 = vector.multi_reduction <add>, %30, %cst_13 [1] : vector<64x32xf32> to vector<64xf32>
    %32 = vector.shape_cast %31 : vector<64xf32> to vector<64x1xf32>
    %cst_14 = arith.constant 3.200000e+01 : f32
    %33 = vector.broadcast %cst_14 : f32 to vector<64x1xf32>
    %34 = arith.divf %32, %33 : vector<64x1xf32>
    %35 = vector.broadcast %27 : vector<64x1xf32> to vector<64x32xf32>
    %36 = arith.subf %23, %35 : vector<64x32xf32>
    %cst_15 = arith.constant 9.99999974E-6 : f32
    %37 = vector.broadcast %cst_15 : f32 to vector<64x1xf32>
    %38 = arith.addf %34, %37 : vector<64x1xf32>
    %39 = math.rsqrt %38 : vector<64x1xf32>
    %40 = vector.broadcast %39 : vector<64x1xf32> to vector<64x32xf32>
    %41 = arith.mulf %36, %40 : vector<64x32xf32>
    %c0_16 = arith.constant 0 : index
    %c0_17 = arith.constant 0 : index
    %42 = vector.load %arg4[%c0_16, %c0_17] : memref<1x32xf32, #tpu.memory_space<vmem>>, vector<1x32xf32>
    %43 = vector.broadcast %42 : vector<1x32xf32> to vector<64x32xf32>
    %44 = arith.mulf %41, %43 : vector<64x32xf32>
    %c0_18 = arith.constant 0 : index
    %c0_19 = arith.constant 0 : index
    %45 = vector.load %arg5[%c0_18, %c0_19] : memref<1x32xf32, #tpu.memory_space<vmem>>, vector<1x32xf32>
    %46 = vector.broadcast %45 : vector<1x32xf32> to vector<64x32xf32>
    %47 = arith.addf %44, %46 : vector<64x32xf32>
    %cst_20 = arith.constant 0.000000e+00 : f32
    %48 = vector.broadcast %cst_20 : f32 to vector<64x32xf32>
    %49 = arith.maximumf %47, %48 : vector<64x32xf32>
    %50 = vector.shape_cast %49 : vector<64x32xf32> to vector<8x8x32xf32>
    %c0_21 = arith.constant 0 : index
    %c0_22 = arith.constant 0 : index
    %c0_23 = arith.constant 0 : index
    %51 = vector.load %arg6[%c0_21, %c0_22, %c0_23] : memref<8x8x32xf32, #tpu.memory_space<vmem>>, vector<8x8x32xf32>
    tpu.vector_store %arg6[%c0_21, %c0_22, %c0_23], %50 {strides = array<i32>} : memref<8x8x32xf32, #tpu.memory_space<vmem>>, vector<8x8x32xf32>,
    return
  }
  func.func @transform_0(%arg0: i32) -> (i32, i32, i32) {
    %c0_i32 = arith.constant 0 : i32
    %c0_i32_0 = arith.constant 0 : i32
    %c0_i32_1 = arith.constant 0 : i32
    return %c0_i32, %arg0, %c0_i32_0 : i32, i32, i32
  }
  func.func @transform_1(%arg0: i32) -> (i32, i32) {
    %c0_i32 = arith.constant 0 : i32
    %c0_i32_0 = arith.constant 0 : i32
    %c0_i32_1 = arith.constant 0 : i32
    return %c0_i32, %c0_i32_0 : i32, i32
  }
  func.func @transform_2(%arg0: i32) -> (i32, i32) {
    %c0_i32 = arith.constant 0 : i32
    %c0_i32_0 = arith.constant 0 : i32
    %c0_i32_1 = arith.constant 0 : i32
    return %c0_i32, %c0_i32_0 : i32, i32
  }
  func.func @transform_3(%arg0: i32) -> (i32, i32) {
    %c0_i32 = arith.constant 0 : i32
    %c0_i32_0 = arith.constant 0 : i32
    %c0_i32_1 = arith.constant 0 : i32
    return %c0_i32, %c0_i32_0 : i32, i32
  }
  func.func @transform_4(%arg0: i32) -> (i32, i32) {
    %c0_i32 = arith.constant 0 : i32
    %c0_i32_0 = arith.constant 0 : i32
    %c0_i32_1 = arith.constant 0 : i32
    return %c0_i32, %c0_i32_0 : i32, i32
  }
  func.func @transform_5(%arg0: i32) -> (i32, i32, i32) {
    %c0_i32 = arith.constant 0 : i32
    %c0_i32_0 = arith.constant 0 : i32
    %c0_i32_1 = arith.constant 0 : i32
    return %c0_i32, %arg0, %c0_i32_0 : i32, i32, i32
  }
}

module attributes {stable_mosaic.version = 11 : i64} {
  func.func @blstm_layer_kernel(%arg0: i32, %arg1: memref<8x8x32xf32, #tpu.memory_space<vmem>>, %arg2: memref<32x128xbf16, #tpu.memory_space<vmem>>, %arg3: memref<16x64xbf16, #tpu.memory_space<vmem>>, %arg4: memref<16x64xbf16, #tpu.memory_space<vmem>>, %arg5: memref<1x128xf32, #tpu.memory_space<vmem>>, %arg6: memref<1x32xf32, #tpu.memory_space<vmem>>, %arg7: memref<1x32xf32, #tpu.memory_space<vmem>>, %arg8: memref<8x8x32xf32, #tpu.memory_space<vmem>>, %arg9: memref<8x8x128xf32, #tpu.memory_space<vmem>>) attributes {dimension_semantics = [#tpu.dimension_semantics<parallel>], iteration_bounds = array<i64: 1>, scalar_prefetch = 0 : i64, scratch_operands = 1 : i64, tpu.core_type = #tpu.core_type<tc>, window_params = [{transform_indices = @transform_0, window_bounds = array<i64: 8, 8, 32>}, {pipeline_mode = #tpu.pipeline_mode<synchronous>, transform_indices = @transform_1, window_bounds = array<i64: 32, 128>}, {pipeline_mode = #tpu.pipeline_mode<synchronous>, transform_indices = @transform_2, window_bounds = array<i64: 16, 64>}, {pipeline_mode = #tpu.pipeline_mode<synchronous>, transform_indices = @transform_3, window_bounds = array<i64: 16, 64>}, {pipeline_mode = #tpu.pipeline_mode<synchronous>, transform_indices = @transform_4, window_bounds = array<i64: 1, 128>}, {pipeline_mode = #tpu.pipeline_mode<synchronous>, transform_indices = @transform_5, window_bounds = array<i64: 1, 32>}, {pipeline_mode = #tpu.pipeline_mode<synchronous>, transform_indices = @transform_6, window_bounds = array<i64: 1, 32>}, {transform_indices = @transform_7, window_bounds = array<i64: 8, 8, 32>}]} {
    %c0 = arith.constant 0 : index
    %c0_0 = arith.constant 0 : index
    %c0_1 = arith.constant 0 : index
    %0 = vector.load %arg1[%c0, %c0_0, %c0_1] : memref<8x8x32xf32, #tpu.memory_space<vmem>>, vector<8x8x32xf32>
    %1 = vector.shape_cast %0 : vector<8x8x32xf32> to vector<64x32xf32>
    %2 = arith.truncf %1 : vector<64x32xf32> to vector<64x32xbf16>
    %c0_2 = arith.constant 0 : index
    %c0_3 = arith.constant 0 : index
    %3 = vector.load %arg2[%c0_2, %c0_3] : memref<32x128xbf16, #tpu.memory_space<vmem>>, vector<32x128xbf16>
    %cst = arith.constant dense<0.000000e+00> : vector<64x128xf32>
    %4 = tpu.matmul %2, %3, %cst {dimension_numbers = #tpu.dot_dimension_numbers<[1], [0], [0], [1], [0, 0, 1, 1], [], []>} : vector<64x32xbf16>, vector<32x128xbf16>, vector<64x128xf32> -> vector<64x128xf32>
    %c0_4 = arith.constant 0 : index
    %c0_5 = arith.constant 0 : index
    %5 = vector.load %arg5[%c0_4, %c0_5] : memref<1x128xf32, #tpu.memory_space<vmem>>, vector<1x128xf32>
    %6 = vector.broadcast %5 : vector<1x128xf32> to vector<64x128xf32>
    %7 = arith.addf %4, %6 : vector<64x128xf32>
    %8 = vector.shape_cast %7 : vector<64x128xf32> to vector<8x8x128xf32>
    %c0_6 = arith.constant 0 : index
    %c0_7 = arith.constant 0 : index
    %c0_8 = arith.constant 0 : index
    %9 = vector.load %arg9[%c0_6, %c0_7, %c0_8] : memref<8x8x128xf32, #tpu.memory_space<vmem>>, vector<8x8x128xf32>
    tpu.vector_store %arg9[%c0_6, %c0_7, %c0_8], %8 {strides = array<i32>} : memref<8x8x128xf32, #tpu.memory_space<vmem>>, vector<8x8x128xf32>,
    %c0_9 = arith.constant 0 : index
    %c0_10 = arith.constant 0 : index
    %10 = vector.load %arg3[%c0_9, %c0_10] : memref<16x64xbf16, #tpu.memory_space<vmem>>, vector<16x64xbf16>
    %c0_11 = arith.constant 0 : index
    %c0_12 = arith.constant 0 : index
    %11 = vector.load %arg4[%c0_11, %c0_12] : memref<16x64xbf16, #tpu.memory_space<vmem>>, vector<16x64xbf16>
    %cst_13 = arith.constant 0.000000e+00 : f32
    %12 = vector.broadcast %cst_13 : f32 to vector<8x16xf32>
    %c0_i32 = arith.constant 0 : i32
    %c8_i32 = arith.constant 8 : i32
    %13 = arith.addi %c0_i32, %c8_i32 : i32
    %c1_i32 = arith.constant 1 : i32
    %14:4 = scf.for %arg10 = %c0_i32 to %13 step %c1_i32 iter_args(%arg11 = %12, %arg12 = %12, %arg13 = %12, %arg14 = %12) -> (vector<8x16xf32>, vector<8x16xf32>, vector<8x16xf32>, vector<8x16xf32>)  : i32 {
      %c7_i32 = arith.constant 7 : i32
      %43 = arith.subi %c7_i32, %arg10 : i32
      %44 = arith.truncf %arg11 : vector<8x16xf32> to vector<8x16xbf16>
      %cst_30 = arith.constant dense<0.000000e+00> : vector<8x64xf32>
      %45 = tpu.matmul %44, %10, %cst_30 {dimension_numbers = #tpu.dot_dimension_numbers<[1], [0], [0], [1], [0, 0, 1, 1], [], []>} : vector<8x16xbf16>, vector<16x64xbf16>, vector<8x64xf32> -> vector<8x64xf32>
      %46 = arith.truncf %arg13 : vector<8x16xf32> to vector<8x16xbf16>
      %cst_31 = arith.constant dense<0.000000e+00> : vector<8x64xf32>
      %47 = tpu.matmul %46, %11, %cst_31 {dimension_numbers = #tpu.dot_dimension_numbers<[1], [0], [0], [1], [0, 0, 1, 1], [], []>} : vector<8x16xbf16>, vector<16x64xbf16>, vector<8x64xf32> -> vector<8x64xf32>
      %48 = arith.index_cast %arg10 : i32 to index
      %c0_32 = arith.constant 0 : index
      %c0_33 = arith.constant 0 : index
      %49 = vector.load %arg9[%48, %c0_32, %c0_33] : memref<8x8x128xf32, #tpu.memory_space<vmem>>, vector<1x8x64xf32>
      %50 = vector.shape_cast %49 : vector<1x8x64xf32> to vector<8x64xf32>
      %51 = arith.addf %50, %45 : vector<8x64xf32>
      %52 = arith.index_cast %43 : i32 to index
      %c0_34 = arith.constant 0 : index
      %c64 = arith.constant 64 : index
      %53 = vector.load %arg9[%52, %c0_34, %c64] : memref<8x8x128xf32, #tpu.memory_space<vmem>>, vector<1x8x64xf32>
      %54 = vector.shape_cast %53 : vector<1x8x64xf32> to vector<8x64xf32>
      %55 = arith.addf %54, %47 : vector<8x64xf32>
      %56 = vector.extract_strided_slice %51 {offsets = [0, 0], sizes = [8, 16], strides = [1, 1]} : vector<8x64xf32> to vector<8x16xf32>
      %57 = arith.negf %56 : vector<8x16xf32>
      %58 = math.exp %57 : vector<8x16xf32>
      %cst_35 = arith.constant 1.000000e+00 : f32
      %59 = vector.broadcast %cst_35 : f32 to vector<8x16xf32>
      %60 = arith.addf %59, %58 : vector<8x16xf32>
      %61 = arith.divf %59, %60 : vector<8x16xf32>
      %62 = vector.extract_strided_slice %51 {offsets = [0, 16], sizes = [8, 16], strides = [1, 1]} : vector<8x64xf32> to vector<8x16xf32>
      %63 = arith.negf %62 : vector<8x16xf32>
      %64 = math.exp %63 : vector<8x16xf32>
      %cst_36 = arith.constant 1.000000e+00 : f32
      %65 = vector.broadcast %cst_36 : f32 to vector<8x16xf32>
      %66 = arith.addf %65, %64 : vector<8x16xf32>
      %67 = arith.divf %65, %66 : vector<8x16xf32>
      %68 = vector.extract_strided_slice %51 {offsets = [0, 32], sizes = [8, 16], strides = [1, 1]} : vector<8x64xf32> to vector<8x16xf32>
      %69 = math.tanh %68 : vector<8x16xf32>
      %70 = vector.extract_strided_slice %51 {offsets = [0, 48], sizes = [8, 16], strides = [1, 1]} : vector<8x64xf32> to vector<8x16xf32>
      %71 = arith.negf %70 : vector<8x16xf32>
      %72 = math.exp %71 : vector<8x16xf32>
      %cst_37 = arith.constant 1.000000e+00 : f32
      %73 = vector.broadcast %cst_37 : f32 to vector<8x16xf32>
      %74 = arith.addf %73, %72 : vector<8x16xf32>
      %75 = arith.divf %73, %74 : vector<8x16xf32>
      %76 = arith.mulf %67, %arg12 : vector<8x16xf32>
      %77 = arith.mulf %61, %69 : vector<8x16xf32>
      %78 = arith.addf %76, %77 : vector<8x16xf32>
      %79 = math.tanh %78 : vector<8x16xf32>
      %80 = arith.mulf %75, %79 : vector<8x16xf32>
      %81 = vector.extract_strided_slice %55 {offsets = [0, 0], sizes = [8, 16], strides = [1, 1]} : vector<8x64xf32> to vector<8x16xf32>
      %82 = arith.negf %81 : vector<8x16xf32>
      %83 = math.exp %82 : vector<8x16xf32>
      %cst_38 = arith.constant 1.000000e+00 : f32
      %84 = vector.broadcast %cst_38 : f32 to vector<8x16xf32>
      %85 = arith.addf %84, %83 : vector<8x16xf32>
      %86 = arith.divf %84, %85 : vector<8x16xf32>
      %87 = vector.extract_strided_slice %55 {offsets = [0, 16], sizes = [8, 16], strides = [1, 1]} : vector<8x64xf32> to vector<8x16xf32>
      %88 = arith.negf %87 : vector<8x16xf32>
      %89 = math.exp %88 : vector<8x16xf32>
      %cst_39 = arith.constant 1.000000e+00 : f32
      %90 = vector.broadcast %cst_39 : f32 to vector<8x16xf32>
      %91 = arith.addf %90, %89 : vector<8x16xf32>
      %92 = arith.divf %90, %91 : vector<8x16xf32>
      %93 = vector.extract_strided_slice %55 {offsets = [0, 32], sizes = [8, 16], strides = [1, 1]} : vector<8x64xf32> to vector<8x16xf32>
      %94 = math.tanh %93 : vector<8x16xf32>
      %95 = vector.extract_strided_slice %55 {offsets = [0, 48], sizes = [8, 16], strides = [1, 1]} : vector<8x64xf32> to vector<8x16xf32>
      %96 = arith.negf %95 : vector<8x16xf32>
      %97 = math.exp %96 : vector<8x16xf32>
      %cst_40 = arith.constant 1.000000e+00 : f32
      %98 = vector.broadcast %cst_40 : f32 to vector<8x16xf32>
      %99 = arith.addf %98, %97 : vector<8x16xf32>
      %100 = arith.divf %98, %99 : vector<8x16xf32>
      %101 = arith.mulf %92, %arg14 : vector<8x16xf32>
      %102 = arith.mulf %86, %94 : vector<8x16xf32>
      %103 = arith.addf %101, %102 : vector<8x16xf32>
      %104 = math.tanh %103 : vector<8x16xf32>
      %105 = arith.mulf %100, %104 : vector<8x16xf32>
      %106 = arith.index_cast %arg10 : i32 to index
      %c0_41 = arith.constant 0 : index
      %c0_42 = arith.constant 0 : index
      %107 = vector.load %arg8[%106, %c0_41, %c0_42] : memref<8x8x32xf32, #tpu.memory_space<vmem>>, vector<1x8x16xf32>
      %108 = vector.shape_cast %107 : vector<1x8x16xf32> to vector<8x16xf32>
      %109 = vector.shape_cast %80 : vector<8x16xf32> to vector<1x8x16xf32>
      tpu.vector_store %arg8[%106, %c0_41, %c0_42], %109 {strides = array<i32>} : memref<8x8x32xf32, #tpu.memory_space<vmem>>, vector<1x8x16xf32>,
      %110 = arith.index_cast %43 : i32 to index
      %c0_43 = arith.constant 0 : index
      %c16 = arith.constant 16 : index
      %111 = vector.load %arg8[%110, %c0_43, %c16] : memref<8x8x32xf32, #tpu.memory_space<vmem>>, vector<1x8x16xf32>
      %112 = vector.shape_cast %111 : vector<1x8x16xf32> to vector<8x16xf32>
      %113 = vector.shape_cast %105 : vector<8x16xf32> to vector<1x8x16xf32>
      tpu.vector_store %arg8[%110, %c0_43, %c16], %113 {strides = array<i32>} : memref<8x8x32xf32, #tpu.memory_space<vmem>>, vector<1x8x16xf32>,
      scf.yield %80, %78, %105, %103 : vector<8x16xf32>, vector<8x16xf32>, vector<8x16xf32>, vector<8x16xf32>
    }
    %c8_i32_14 = arith.constant 8 : i32
    %c0_15 = arith.constant 0 : index
    %c0_16 = arith.constant 0 : index
    %c0_17 = arith.constant 0 : index
    %15 = vector.load %arg8[%c0_15, %c0_16, %c0_17] : memref<8x8x32xf32, #tpu.memory_space<vmem>>, vector<8x8x32xf32>
    %cst_18 = arith.constant dense<0.000000e+00> : vector<8x8xf32>
    %16 = vector.multi_reduction <add>, %15, %cst_18 [2] : vector<8x8x32xf32> to vector<8x8xf32>
    %17 = vector.shape_cast %16 : vector<8x8xf32> to vector<8x8x1xf32>
    %cst_19 = arith.constant 3.200000e+01 : f32
    %18 = vector.broadcast %cst_19 : f32 to vector<8x8x1xf32>
    %19 = arith.divf %17, %18 : vector<8x8x1xf32>
    %20 = vector.broadcast %19 : vector<8x8x1xf32> to vector<8x8x32xf32>
    %21 = arith.subf %15, %20 : vector<8x8x32xf32>
    %22 = arith.mulf %21, %21 : vector<8x8x32xf32>
    %cst_20 = arith.constant dense<0.000000e+00> : vector<8x8xf32>
    %23 = vector.multi_reduction <add>, %22, %cst_20 [2] : vector<8x8x32xf32> to vector<8x8xf32>
    %24 = vector.shape_cast %23 : vector<8x8xf32> to vector<8x8x1xf32>
    %cst_21 = arith.constant 3.200000e+01 : f32
    %25 = vector.broadcast %cst_21 : f32 to vector<8x8x1xf32>
    %26 = arith.divf %24, %25 : vector<8x8x1xf32>
    %27 = vector.broadcast %19 : vector<8x8x1xf32> to vector<8x8x32xf32>
    %28 = arith.subf %15, %27 : vector<8x8x32xf32>
    %cst_22 = arith.constant 9.99999974E-6 : f32
    %29 = vector.broadcast %cst_22 : f32 to vector<8x8x1xf32>
    %30 = arith.addf %26, %29 : vector<8x8x1xf32>
    %31 = math.rsqrt %30 : vector<8x8x1xf32>
    %32 = vector.broadcast %31 : vector<8x8x1xf32> to vector<8x8x32xf32>
    %33 = arith.mulf %28, %32 : vector<8x8x32xf32>
    %c0_23 = arith.constant 0 : index
    %c0_24 = arith.constant 0 : index
    %34 = vector.load %arg6[%c0_23, %c0_24] : memref<1x32xf32, #tpu.memory_space<vmem>>, vector<1x32xf32>
    %35 = vector.shape_cast %34 : vector<1x32xf32> to vector<1x1x32xf32>
    %36 = vector.broadcast %35 : vector<1x1x32xf32> to vector<8x8x32xf32>
    %37 = arith.mulf %33, %36 : vector<8x8x32xf32>
    %c0_25 = arith.constant 0 : index
    %c0_26 = arith.constant 0 : index
    %38 = vector.load %arg7[%c0_25, %c0_26] : memref<1x32xf32, #tpu.memory_space<vmem>>, vector<1x32xf32>
    %39 = vector.shape_cast %38 : vector<1x32xf32> to vector<1x1x32xf32>
    %40 = vector.broadcast %39 : vector<1x1x32xf32> to vector<8x8x32xf32>
    %41 = arith.addf %37, %40 : vector<8x8x32xf32>
    %c0_27 = arith.constant 0 : index
    %c0_28 = arith.constant 0 : index
    %c0_29 = arith.constant 0 : index
    %42 = vector.load %arg8[%c0_27, %c0_28, %c0_29] : memref<8x8x32xf32, #tpu.memory_space<vmem>>, vector<8x8x32xf32>
    tpu.vector_store %arg8[%c0_27, %c0_28, %c0_29], %41 {strides = array<i32>} : memref<8x8x32xf32, #tpu.memory_space<vmem>>, vector<8x8x32xf32>,
    return
  }
  func.func @transform_0(%arg0: i32) -> (i32, i32, i32) {
    %c0_i32 = arith.constant 0 : i32
    %c0_i32_0 = arith.constant 0 : i32
    %c0_i32_1 = arith.constant 0 : i32
    return %c0_i32, %arg0, %c0_i32_0 : i32, i32, i32
  }
  func.func @transform_1(%arg0: i32) -> (i32, i32) {
    %c0_i32 = arith.constant 0 : i32
    %c0_i32_0 = arith.constant 0 : i32
    %c0_i32_1 = arith.constant 0 : i32
    return %c0_i32, %c0_i32_0 : i32, i32
  }
  func.func @transform_2(%arg0: i32) -> (i32, i32) {
    %c0_i32 = arith.constant 0 : i32
    %c0_i32_0 = arith.constant 0 : i32
    %c0_i32_1 = arith.constant 0 : i32
    return %c0_i32, %c0_i32_0 : i32, i32
  }
  func.func @transform_3(%arg0: i32) -> (i32, i32) {
    %c0_i32 = arith.constant 0 : i32
    %c0_i32_0 = arith.constant 0 : i32
    %c0_i32_1 = arith.constant 0 : i32
    return %c0_i32, %c0_i32_0 : i32, i32
  }
  func.func @transform_4(%arg0: i32) -> (i32, i32) {
    %c0_i32 = arith.constant 0 : i32
    %c0_i32_0 = arith.constant 0 : i32
    %c0_i32_1 = arith.constant 0 : i32
    return %c0_i32, %c0_i32_0 : i32, i32
  }
  func.func @transform_5(%arg0: i32) -> (i32, i32) {
    %c0_i32 = arith.constant 0 : i32
    %c0_i32_0 = arith.constant 0 : i32
    %c0_i32_1 = arith.constant 0 : i32
    return %c0_i32, %c0_i32_0 : i32, i32
  }
  func.func @transform_6(%arg0: i32) -> (i32, i32) {
    %c0_i32 = arith.constant 0 : i32
    %c0_i32_0 = arith.constant 0 : i32
    %c0_i32_1 = arith.constant 0 : i32
    return %c0_i32, %c0_i32_0 : i32, i32
  }
  func.func @transform_7(%arg0: i32) -> (i32, i32, i32) {
    %c0_i32 = arith.constant 0 : i32
    %c0_i32_0 = arith.constant 0 : i32
    %c0_i32_1 = arith.constant 0 : i32
    return %c0_i32, %arg0, %c0_i32_0 : i32, i32, i32
  }
}

</mosaic_0001>

<llo_original>
// kernel: blstm_forward.7
$region0: #{blstm_forward.7}
  #allocation0 [shape = 'u32[]', space=smem, size = 0x4, offset = 0x4, fixed_abs, tag = 'smem constant byte address 0x4 - core index']
  #allocation1 [shape = 'u32[144,128]{1,0:T(1,128)}', space=vmem, size = 0x12000, scoped, tag = 'internal scratch']
  %s0 = inlined_call_operand.vmem [shape: f32[8,8,32], index: 0, kind: input, shape index: {}]
  %s1 = inlined_call_operand.vmem [shape: f32[8,8,16], index: 1, kind: input, shape index: {}]
  %s2 = inlined_call_operand.vmem [shape: bf16[32,128], index: 2, kind: input, shape index: {}]
  %s3 = inlined_call_operand.vmem [shape: f32[1,128], index: 3, kind: input, shape index: {}]
  %s4 = inlined_call_operand.vmem [shape: f32[8,8,128], index: 4, kind: output, shape index: {0}]
  %s5 = inlined_call_operand.vmem [shape: f32[8,2,8,16], index: 5, kind: output, shape index: {1}]
  %6 = xla_tuple %s4, %s5
  %s7 = sld [smem:[#allocation0]]
  $region34: #{blstm_forward.7} parent=0
    _
  %s9 = ssub.s32 1, %s7
  %s10 = scalar_select 0, %s9, %s7
  // Predicated region
  $region2: #{blstm_forward.7} parent=0 // pred_check
    _
  $region3: #{blstm_forward.7} parent=0 // pred_check_branch
    %12 = sbr.rel (0) target = $region5
  $region4: #{blstm_forward.7} parent=0 // pred_region
    _
  $region5: #{blstm_forward.7} parent=0 // pred_fallthru
    _
  // Predicated region
  $region6: #{blstm_forward.7} parent=0 // pred_check
    _
  $region7: #{blstm_forward.7} parent=0 // pred_check_branch
    %14 = sbr.rel (0) target = $region9
  $region8: #{blstm_forward.7} parent=0 // pred_region
    _
  $region9: #{blstm_forward.7} parent=0 // pred_fallthru
    _
  // Predicated region
  $region10: #{blstm_forward.7} parent=0 // pred_check
    _
  $region11: #{blstm_forward.7} parent=0 // pred_check_branch
    %16 = sbr.rel (0) target = $region13
  $region12: #{blstm_forward.7} parent=0 // pred_region
    _
  $region13: #{blstm_forward.7} parent=0 // pred_fallthru
    _
  // Predicated region
  $region14: #{blstm_forward.7} parent=0 // pred_check
    _
  $region15: #{blstm_forward.7} parent=0 // pred_check_branch
    %18 = sbr.rel (0) target = $region17
  $region16: #{blstm_forward.7} parent=0 // pred_region
    _
  $region17: #{blstm_forward.7} parent=0 // pred_fallthru
    _
  %v20 = vld [vmem:[%s0] sm:$0xff]
  %v21 = vld [vmem:[%s0 + $0x8] sm:$0xff]
  %v22 = vld [vmem:[%s0 + $0x10] sm:$0xff]
  %v23 = vld [vmem:[%s0 + $0x18] sm:$0xff]
  %v24 = vld [vmem:[%s0 + $0x20] sm:$0xff]
  %v25 = vld [vmem:[%s0 + $0x28] sm:$0xff]
  %v26 = vld [vmem:[%s0 + $0x30] sm:$0xff]
  %v27 = vld [vmem:[%s0 + $0x38] sm:$0xff]
  %v28 = vpack.c.bf16 %v21, %v20
  %v29 = vpack.c.bf16 %v23, %v22
  %v30 = vpack.c.bf16 %v25, %v24
  %v31 = vpack.c.bf16 %v27, %v26
  %v32 = vld [vmem:[%s2] sm:$0xf]
  %v33 = vld [vmem:[%s2 + $0x4] sm:$0xf]
  %v34 = vld [vmem:[%s2 + $0x8] sm:$0xf]
  %v35 = vld [vmem:[%s2 + $0xc] sm:$0xf]
  %v36 = vld [vmem:[%s3] sm:$0x1]
  %v38 = vlaneseq
  %v39 = vshrl.u32 %v38, 7
  %v40 = vsub.s32 0, %v39
  %v41 = vrot.slane %v36, %v40
  %v47 = vunpack.c.l.b16 %v32
  %v48 = vunpack.c.l.b16 %v33
  %v49 = vunpack.c.l.b16 %v34
  %v50 = vunpack.c.l.b16 %v35
  %v51 = vpack.c.b16 %v48, %v47
  %v52 = vpack.c.b16 %v50, %v49
  %vm55 = vcmask 261120
  %v57 = vsel %vm55, %v28, 0
  %v60 = vsel %vm55, %v29, 0
  %v63 = vsel %vm55, %v30, 0
  %v66 = vsel %vm55, %v31, 0
  %68 = vmatprep.subr.bf16.mxu0 0
  %69 = vmatpush1.bf16.msra.mxu0 %v51
  %70 = vmatprep.subr.bf16.mxu0 0
  %71 = vmatpush1.bf16.msra.mxu0 %v52
  %72 = vmatprep.subr.bf16.mxu0 0
  %73 = vmatpush1.bf16.msra.mxu0 0
  %74 = vmatprep.subr.bf16.mxu0 0
  %75 = vmatpush1.bf16.msra.mxu0 0
  %76 = vmatprep.subr.bf16.mxu0 0
  %77 = vmatpush1.bf16.msra.mxu0 0
  %78 = vmatprep.subr.bf16.mxu0 0
  %79 = vmatpush1.bf16.msra.mxu0 0
  %80 = vmatprep.subr.bf16.mxu0 0
  %81 = vmatpush1.bf16.msra.mxu0 0
  %82 = vmatprep.subr.bf16.mxu0 0
  %83 = vmatpush1.bf16.msra.mxu0 0
  %84 = vmatprep.subr.bf16.mxu0 0
  %85 = vmatpush1.bf16.msra.mxu0 0
  %86 = vmatprep.subr.bf16.mxu0 0
  %87 = vmatpush1.bf16.msra.mxu0 0
  %88 = vmatprep.subr.bf16.mxu0 0
  %89 = vmatpush1.bf16.msra.mxu0 0
  %90 = vmatprep.subr.bf16.mxu0 0
  %91 = vmatpush1.bf16.msra.mxu0 0
  %92 = vmatprep.subr.bf16.mxu0 0
  %93 = vmatpush1.bf16.msra.mxu0 0
  %94 = vmatprep.subr.bf16.mxu0 0
  %95 = vmatpush1.bf16.msra.mxu0 0
  %96 = vmatprep.subr.bf16.mxu0 0
  %97 = vmatpush1.bf16.msra.mxu0 0
  %98 = vmatprep.subr.bf16.mxu0 0
  %99 = vmatpush1.bf16.msra.mxu0 0
  %100 = vmatprep.mubr.bf16.mxu0 0
  %101 = vmatmul.mubr.bf16.gmra.mrb[0].mxu0 %v57
  %v102 = vpop.f32.mrb[0].mxu0
  %v103 = vadd.f32 %v41, %v102
  %v104 = vpop.f32.mrb[0].mxu0
  %v105 = vpop.f32.mrb[0].mxu0
  %v106 = vadd.f32 %v41, %v105
  %v107 = vpop.f32.mrb[0].mxu0
  %108 = vmatprep.mubr.bf16.mxu0 0
  %109 = vmatmul.mubr.bf16.gmra.mrb[0].mxu0 %v60
  %v110 = vpop.f32.mrb[0].mxu0
  %v111 = vadd.f32 %v41, %v110
  %v112 = vpop.f32.mrb[0].mxu0
  %v113 = vpop.f32.mrb[0].mxu0
  %v114 = vadd.f32 %v41, %v113
  %v115 = vpop.f32.mrb[0].mxu0
  %116 = vmatprep.mubr.bf16.mxu0 0
  %117 = vmatmul.mubr.bf16.gmra.mrb[0].mxu0 %v63
  %v118 = vpop.f32.mrb[0].mxu0
  %v119 = vadd.f32 %v41, %v118
  %v120 = vpop.f32.mrb[0].mxu0
  %v121 = vpop.f32.mrb[0].mxu0
  %v122 = vadd.f32 %v41, %v121
  %v123 = vpop.f32.mrb[0].mxu0
  %124 = vmatprep.mubr.bf16.mxu0 0
  %125 = vmatmul.mubr.bf16.gmra.mrb[0].mxu0 %v66
  %v126 = vpop.f32.mrb[0].mxu0
  %v127 = vadd.f32 %v41, %v126
  %v128 = vpop.f32.mrb[0].mxu0
  %v129 = vpop.f32.mrb[0].mxu0
  %v130 = vadd.f32 %v41, %v129
  %v131 = vpop.f32.mrb[0].mxu0
  %132 = vdwg.mxu0
  %v133 = vmax.f32 %v103, 0.0
  %v134 = vmax.f32 %v106, 0.0
  %v135 = vmax.f32 %v111, 0.0
  %v136 = vmax.f32 %v114, 0.0
  %v137 = vmax.f32 %v119, 0.0
  %v138 = vmax.f32 %v122, 0.0
  %v139 = vmax.f32 %v127, 0.0
  %v140 = vmax.f32 %v130, 0.0
  %141 = vst [vmem:[%s4] sm:$0xff] %v133
  %142 = vst [vmem:[%s4 + $0x8] sm:$0xff] %v134
  %143 = vst [vmem:[%s4 + $0x10] sm:$0xff] %v135
  %144 = vst [vmem:[%s4 + $0x18] sm:$0xff] %v136
  %145 = vst [vmem:[%s4 + $0x20] sm:$0xff] %v137
  %146 = vst [vmem:[%s4 + $0x28] sm:$0xff] %v138
  %147 = vst [vmem:[%s4 + $0x30] sm:$0xff] %v139
  %148 = vst [vmem:[%s4 + $0x38] sm:$0xff] %v140
  %v149 = vld [vmem:[%s1] sm:$0xff]
  %v150 = vld [vmem:[%s1 + $0x8] sm:$0xff]
  %v151 = vld [vmem:[%s1 + $0x10] sm:$0xff]
  %v152 = vld [vmem:[%s1 + $0x18] sm:$0xff]
  %v153 = vld [vmem:[%s1 + $0x20] sm:$0xff]
  %v154 = vld [vmem:[%s1 + $0x28] sm:$0xff]
  %v155 = vld [vmem:[%s1 + $0x30] sm:$0xff]
  %v156 = vld [vmem:[%s1 + $0x38] sm:$0xff]
  %v157 = vmul.f32 %v133, %v149
  %v158 = vmul.f32 %v134, %v150
  %v159 = vmul.f32 %v135, %v151
  %v160 = vmul.f32 %v136, %v152
  %v161 = vmul.f32 %v137, %v153
  %v162 = vmul.f32 %v138, %v154
  %v163 = vmul.f32 %v139, %v155
  %v164 = vmul.f32 %v140, %v156
  %vm165 = vcmask 130048
  %166 = vst.msk [vmem:[%s5] sm:$0xff] %vm165, %v157
  %167 = vst.msk [vmem:[%s5 + $0x10] sm:$0xff] %vm165, %v158
  %168 = vst.msk [vmem:[%s5 + $0x20] sm:$0xff] %vm165, %v159
  %169 = vst.msk [vmem:[%s5 + $0x30] sm:$0xff] %vm165, %v160
  %170 = vst.msk [vmem:[%s5 + $0x40] sm:$0xff] %vm165, %v161
  %171 = vst.msk [vmem:[%s5 + $0x50] sm:$0xff] %vm165, %v162
  %172 = vst.msk [vmem:[%s5 + $0x60] sm:$0xff] %vm165, %v163
  %173 = vst.msk [vmem:[%s5 + $0x70] sm:$0xff] %vm165, %v164
  %182 = vrot.lane.b32.xlu0 %v149, 16
  %v183 = vpop.permute.xlu0 %182
  %184 = vrot.lane.b32.xlu0 %v150, 16
  %v185 = vpop.permute.xlu0 %184
  %186 = vrot.lane.b32.xlu0 %v151, 16
  %v187 = vpop.permute.xlu0 %186
  %188 = vrot.lane.b32.xlu0 %v152, 16
  %v189 = vpop.permute.xlu0 %188
  %190 = vrot.lane.b32.xlu0 %v153, 16
  %v191 = vpop.permute.xlu0 %190
  %192 = vrot.lane.b32.xlu0 %v154, 16
  %v193 = vpop.permute.xlu0 %192
  %194 = vrot.lane.b32.xlu0 %v155, 16
  %v195 = vpop.permute.xlu0 %194
  %196 = vrot.lane.b32.xlu0 %v156, 16
  %v197 = vpop.permute.xlu0 %196
  %v206 = vmul.f32 %v133, %v183
  %v207 = vmul.f32 %v134, %v185
  %v208 = vmul.f32 %v135, %v187
  %v209 = vmul.f32 %v136, %v189
  %v210 = vmul.f32 %v137, %v191
  %v211 = vmul.f32 %v138, %v193
  %v212 = vmul.f32 %v139, %v195
  %v213 = vmul.f32 %v140, %v197
  %222 = vrot.lane.b32.xlu0 %v206, 112
  %v223 = vpop.permute.xlu0 %222
  %224 = vrot.lane.b32.xlu0 %v207, 112
  %v225 = vpop.permute.xlu0 %224
  %226 = vrot.lane.b32.xlu0 %v208, 112
  %v227 = vpop.permute.xlu0 %226
  %228 = vrot.lane.b32.xlu0 %v209, 112
  %v229 = vpop.permute.xlu0 %228
  %230 = vrot.lane.b32.xlu0 %v210, 112
  %v231 = vpop.permute.xlu0 %230
  %232 = vrot.lane.b32.xlu0 %v211, 112
  %v233 = vpop.permute.xlu0 %232
  %234 = vrot.lane.b32.xlu0 %v212, 112
  %v235 = vpop.permute.xlu0 %234
  %236 = vrot.lane.b32.xlu0 %v213, 112
  %v237 = vpop.permute.xlu0 %236
  %s246 = scalar_lea.vmem %s5, 8
  %247 = vst.msk [vmem:[%s246] sm:$0xff] %vm165, %v223
  %248 = vst.msk [vmem:[%s246 + $0x10] sm:$0xff] %vm165, %v225
  %249 = vst.msk [vmem:[%s246 + $0x20] sm:$0xff] %vm165, %v227
  %250 = vst.msk [vmem:[%s246 + $0x30] sm:$0xff] %vm165, %v229
  %251 = vst.msk [vmem:[%s246 + $0x40] sm:$0xff] %vm165, %v231
  %252 = vst.msk [vmem:[%s246 + $0x50] sm:$0xff] %vm165, %v233
  %253 = vst.msk [vmem:[%s246 + $0x60] sm:$0xff] %vm165, %v235
  %254 = vst.msk [vmem:[%s246 + $0x70] sm:$0xff] %vm165, %v237
  // Predicated region
  $region18: #{blstm_forward.7} parent=0 // pred_check
    _
  $region19: #{blstm_forward.7} parent=0 // pred_check_branch
    %256 = sbr.rel (0) target = $region21
  $region20: #{blstm_forward.7} parent=0 // pred_region
    _
  $region21: #{blstm_forward.7} parent=0 // pred_fallthru
    _
  // Predicated region
  $region22: #{blstm_forward.7} parent=0 // pred_check
    _
  $region23: #{blstm_forward.7} parent=0 // pred_check_branch
    %258 = sbr.rel (0) target = $region25
  $region24: #{blstm_forward.7} parent=0 // pred_region
    _
  $region25: #{blstm_forward.7} parent=0 // pred_fallthru
    _
  // Predicated region
  $region26: #{blstm_forward.7} parent=0 // pred_check
    _
  $region27: #{blstm_forward.7} parent=0 // pred_check_branch
    %260 = sbr.rel (0) target = $region29
  $region28: #{blstm_forward.7} parent=0 // pred_region
    _
  $region29: #{blstm_forward.7} parent=0 // pred_fallthru
    _
  // Predicated region
  $region30: #{blstm_forward.7} parent=0 // pred_check
    _
  $region31: #{blstm_forward.7} parent=0 // pred_check_branch
    %262 = sbr.rel (0) target = $region33
  $region32: #{blstm_forward.7} parent=0 // pred_region
    _
  $region33: #{blstm_forward.7} parent=0 // pred_fallthru
    _

// kernel: blstm_forward.4
$region0: #{blstm_forward.4}
  #allocation0 [shape = 'u32[]', space=smem, size = 0x4, offset = 0x4, fixed_abs, tag = 'smem constant byte address 0x4 - core index']
  #allocation1 [shape = 'u32[144,128]{1,0:T(1,128)}', space=vmem, size = 0x12000, scoped, tag = 'internal scratch']
  %s0 = inlined_call_operand.vmem [shape: f32[8,8,16], index: 0, kind: input, shape index: {}]
  %s1 = inlined_call_operand.vmem [shape: bf16[16,32], index: 1, kind: input, shape index: {}]
  %s2 = inlined_call_operand.vmem [shape: f32[1,32], index: 2, kind: input, shape index: {}]
  %s3 = inlined_call_operand.vmem [shape: f32[1,32], index: 3, kind: input, shape index: {}]
  %s4 = inlined_call_operand.vmem [shape: f32[1,32], index: 4, kind: input, shape index: {}]
  %s5 = inlined_call_operand.hbm [shape: f32[8,8,32], index: 5, kind: output, shape index: {}]
  %s6 = sld [smem:[#allocation0]]
  $region30: #{blstm_forward.4} parent=0
    _
  %s8 = ssub.s32 1, %s6
  %s9 = scalar_select 0, %s8, %s6
  $region1: #{blstm_forward.4} parent=0
    #allocation2 [shape = 'u8[32768]{0}', space=vmem, size = 0x8000, scoped, tag = 'output window, operand 0, single buffered']
    #allocation3 [shape = 's32[1]{0}', space=sflag, size = 0x4, scoped, tag = 'scoped memory for blstm_forward.4']
    %10 = vsyncpa [#allocation3], 0
    // Predicated region
    $region2: #{blstm_forward.4} parent=1 // pred_check
      _
    $region3: #{blstm_forward.4} parent=1 // pred_check_branch
      %12 = sbr.rel (0) target = $region5
    $region4: #{blstm_forward.4} parent=1 // pred_region
      _
    $region5: #{blstm_forward.4} parent=1 // pred_fallthru
      _
    // Predicated region
    $region6: #{blstm_forward.4} parent=1 // pred_check
      _
    $region7: #{blstm_forward.4} parent=1 // pred_check_branch
      %14 = sbr.rel (0) target = $region9
    $region8: #{blstm_forward.4} parent=1 // pred_region
      _
    $region9: #{blstm_forward.4} parent=1 // pred_fallthru
      _
    // Predicated region
    $region10: #{blstm_forward.4} parent=1 // pred_check
      _
    $region11: #{blstm_forward.4} parent=1 // pred_check_branch
      %16 = sbr.rel (0) target = $region13
    $region12: #{blstm_forward.4} parent=1 // pred_region
      _
    $region13: #{blstm_forward.4} parent=1 // pred_fallthru
      _
    // Predicated region
    $region14: #{blstm_forward.4} parent=1 // pred_check
      _
    $region15: #{blstm_forward.4} parent=1 // pred_check_branch
      %18 = sbr.rel (0) target = $region17
    $region16: #{blstm_forward.4} parent=1 // pred_region
      _
    $region17: #{blstm_forward.4} parent=1 // pred_fallthru
      _
    // Predicated region
    $region18: #{blstm_forward.4} parent=1 // pred_check
      _
    $region19: #{blstm_forward.4} parent=1 // pred_check_branch
      %20 = sbr.rel (0) target = $region21
    $region20: #{blstm_forward.4} parent=1 // pred_region
      _
    $region21: #{blstm_forward.4} parent=1 // pred_fallthru
      _
    %v22 = vld [vmem:[%s0] sm:$0xff]
    %v23 = vld [vmem:[%s0 + $0x8] sm:$0xff]
    %v24 = vld [vmem:[%s0 + $0x10] sm:$0xff]
    %v25 = vld [vmem:[%s0 + $0x18] sm:$0xff]
    %v26 = vld [vmem:[%s0 + $0x20] sm:$0xff]
    %v27 = vld [vmem:[%s0 + $0x28] sm:$0xff]
    %v28 = vld [vmem:[%s0 + $0x30] sm:$0xff]
    %v29 = vld [vmem:[%s0 + $0x38] sm:$0xff]
    %vm30 = vcmask 130048
    %v31 = vsel %vm30, %v22, 0.0
    %v32 = vsel %vm30, %v23, 0.0
    %v33 = vadd.f32 %v31, %v32
    %v34 = vsel %vm30, %v24, 0.0
    %v35 = vadd.f32 %v33, %v34
    %v36 = vsel %vm30, %v25, 0.0
    %v37 = vadd.f32 %v35, %v36
    %v38 = vsel %vm30, %v26, 0.0
    %v39 = vadd.f32 %v37, %v38
    %v40 = vsel %vm30, %v27, 0.0
    %v41 = vadd.f32 %v39, %v40
    %v42 = vsel %vm30, %v28, 0.0
    %v43 = vadd.f32 %v41, %v42
    %v44 = vsel %vm30, %v29, 0.0
    %v45 = vadd.f32 %v43, %v44
    %v46 = vrcp.pop 8.0
    %v47 = vmul.f32 %v45, %v46
    %v48 = vsub.f32 %v22, %v47
    %v49 = vsub.f32 %v23, %v47
    %v50 = vsub.f32 %v24, %v47
    %v51 = vsub.f32 %v25, %v47
    %v52 = vsub.f32 %v26, %v47
    %v53 = vsub.f32 %v27, %v47
    %v54 = vsub.f32 %v28, %v47
    %v55 = vsub.f32 %v29, %v47
    %v56 = vmul.f32 %v48, %v48
    %v57 = vmul.f32 %v49, %v49
    %v58 = vmul.f32 %v50, %v50
    %v59 = vmul.f32 %v51, %v51
    %v60 = vmul.f32 %v52, %v52
    %v61 = vmul.f32 %v53, %v53
    %v62 = vmul.f32 %v54, %v54
    %v63 = vmul.f32 %v55, %v55
    %v64 = vsel %vm30, %v56, 0.0
    %v65 = vsel %vm30, %v57, 0.0
    %v66 = vadd.f32 %v64, %v65
    %v67 = vsel %vm30, %v58, 0.0
    %v68 = vadd.f32 %v66, %v67
    %v69 = vsel %vm30, %v59, 0.0
    %v70 = vadd.f32 %v68, %v69
    %v71 = vsel %vm30, %v60, 0.0
    %v72 = vadd.f32 %v70, %v71
    %v73 = vsel %vm30, %v61, 0.0
    %v74 = vadd.f32 %v72, %v73
    %v75 = vsel %vm30, %v62, 0.0
    %v76 = vadd.f32 %v74, %v75
    %v77 = vsel %vm30, %v63, 0.0
    %v78 = vadd.f32 %v76, %v77
    %v79 = vrcp.pop 7.0
    %v80 = vmul.f32 %v78, %v79
    %v81 = vrsqrt.pop %v80
    %v82 = vmul.f32 %v80, %v81
    %vm83 = vcmp.eq.f32.partialorder %v80, inf
    %v84 = vsel %vm83, %v80, %v82
    %vm85 = vcmp.eq.f32.partialorder %v80, 0.0
    %v86 = vand.u32 %v80, 2147483648
    %v87 = vsel %vm85, %v86, %v84
    %v88 = vadd.f32 %v87, 1.1920929e-07
    %v89 = vrcp.pop %v88
    %v90 = vmul.f32 %v48, %v89
    %v91 = vmul.f32 %v49, %v89
    %v92 = vmul.f32 %v50, %v89
    %v93 = vmul.f32 %v51, %v89
    %v94 = vmul.f32 %v52, %v89
    %v95 = vmul.f32 %v53, %v89
    %v96 = vmul.f32 %v54, %v89
    %v97 = vmul.f32 %v55, %v89
    %v98 = vpack.c.bf16 %v91, %v90
    %v99 = vpack.c.bf16 %v93, %v92
    %v100 = vpack.c.bf16 %v95, %v94
    %v101 = vpack.c.bf16 %v97, %v96
    %v102 = vld [vmem:[%s1] sm:$0xf]
    %v103 = vld [vmem:[%s1 + $0x4] sm:$0xf]
    %v104 = vld [vmem:[%s2] sm:$0x1]
    %v106 = vlaneseq
    %v107 = vshrl.u32 %v106, 7
    %v108 = vsub.s32 0, %v107
    %v109 = vrot.slane %v104, %v108
    %v113 = vunpack.c.l.b16 %v102
    %v114 = vunpack.c.l.b16 %v103
    %v115 = vpack.c.b16 %v114, %v113
    %v118 = vsel %vm30, %v98, 0
    %v121 = vsel %vm30, %v99, 0
    %v124 = vsel %vm30, %v100, 0
    %v127 = vsel %vm30, %v101, 0
    %129 = vmatprep.subr.bf16.mxu0 0
    %130 = vmatpush1.bf16.msra.mxu0 %v115
    %131 = vmatprep.subr.bf16.mxu0 0
    %132 = vmatpush1.bf16.msra.mxu0 0
    %133 = vmatprep.subr.bf16.mxu0 0
    %134 = vmatpush1.bf16.msra.mxu0 0
    %135 = vmatprep.subr.bf16.mxu0 0
    %136 = vmatpush1.bf16.msra.mxu0 0
    %137 = vmatprep.subr.bf16.mxu0 0
    %138 = vmatpush1.bf16.msra.mxu0 0
    %139 = vmatprep.subr.bf16.mxu0 0
    %140 = vmatpush1.bf16.msra.mxu0 0
    %141 = vmatprep.subr.bf16.mxu0 0
    %142 = vmatpush1.bf16.msra.mxu0 0
    %143 = vmatprep.subr.bf16.mxu0 0
    %144 = vmatpush1.bf16.msra.mxu0 0
    %145 = vmatprep.subr.bf16.mxu0 0
    %146 = vmatpush1.bf16.msra.mxu0 0
    %147 = vmatprep.subr.bf16.mxu0 0
    %148 = vmatpush1.bf16.msra.mxu0 0
    %149 = vmatprep.subr.bf16.mxu0 0
    %150 = vmatpush1.bf16.msra.mxu0 0
    %151 = vmatprep.subr.bf16.mxu0 0
    %152 = vmatpush1.bf16.msra.mxu0 0
    %153 = vmatprep.subr.bf16.mxu0 0
    %154 = vmatpush1.bf16.msra.mxu0 0
    %155 = vmatprep.subr.bf16.mxu0 0
    %156 = vmatpush1.bf16.msra.mxu0 0
    %157 = vmatprep.subr.bf16.mxu0 0
    %158 = vmatpush1.bf16.msra.mxu0 0
    %159 = vmatprep.subr.bf16.mxu0 0
    %160 = vmatpush1.bf16.msra.mxu0 0
    %161 = vmatprep.mubr.bf16.mxu0 0
    %162 = vmatmul.mubr.bf16.gmra.mrb[0].mxu0 %v118
    %v163 = vpop.f32.mrb[0].mxu0
    %v164 = vadd.f32 %v109, %v163
    %v165 = vpop.f32.mrb[0].mxu0
    %v166 = vpop.f32.mrb[0].mxu0
    %v167 = vadd.f32 %v109, %v166
    %v168 = vpop.f32.mrb[0].mxu0
    %169 = vmatprep.mubr.bf16.mxu0 0
    %170 = vmatmul.mubr.bf16.gmra.mrb[0].mxu0 %v121
    %v171 = vpop.f32.mrb[0].mxu0
    %v172 = vadd.f32 %v109, %v171
    %v173 = vpop.f32.mrb[0].mxu0
    %v174 = vpop.f32.mrb[0].mxu0
    %v175 = vadd.f32 %v109, %v174
    %v176 = vpop.f32.mrb[0].mxu0
    %177 = vmatprep.mubr.bf16.mxu0 0
    %178 = vmatmul.mubr.bf16.gmra.mrb[0].mxu0 %v124
    %v179 = vpop.f32.mrb[0].mxu0
    %v180 = vadd.f32 %v109, %v179
    %v181 = vpop.f32.mrb[0].mxu0
    %v182 = vpop.f32.mrb[0].mxu0
    %v183 = vadd.f32 %v109, %v182
    %v184 = vpop.f32.mrb[0].mxu0
    %185 = vmatprep.mubr.bf16.mxu0 0
    %186 = vmatmul.mubr.bf16.gmra.mrb[0].mxu0 %v127
    %v187 = vpop.f32.mrb[0].mxu0
    %v188 = vadd.f32 %v109, %v187
    %v189 = vpop.f32.mrb[0].mxu0
    %v190 = vpop.f32.mrb[0].mxu0
    %v191 = vadd.f32 %v109, %v190
    %v192 = vpop.f32.mrb[0].mxu0
    %193 = vdwg.mxu0
    %vm194 = vcmask 261120
    %v195 = vsel %vm194, %v164, 0.0
    %196 = vadd.xlane.f32.xlu0 %v195
    %v197 = vpop.xlane.xlu0 %196
    %v198 = vsel %vm194, %v167, 0.0
    %199 = vadd.xlane.f32.xlu0 %v198
    %v200 = vpop.xlane.xlu0 %199
    %v201 = vsel %vm194, %v172, 0.0
    %202 = vadd.xlane.f32.xlu0 %v201
    %v203 = vpop.xlane.xlu0 %202
    %v204 = vsel %vm194, %v175, 0.0
    %205 = vadd.xlane.f32.xlu0 %v204
    %v206 = vpop.xlane.xlu0 %205
    %v207 = vsel %vm194, %v180, 0.0
    %208 = vadd.xlane.f32.xlu0 %v207
    %v209 = vpop.xlane.xlu0 %208
    %v210 = vsel %vm194, %v183, 0.0
    %211 = vadd.xlane.f32.xlu0 %v210
    %v212 = vpop.xlane.xlu0 %211
    %v213 = vsel %vm194, %v188, 0.0
    %214 = vadd.xlane.f32.xlu0 %v213
    %v215 = vpop.xlane.xlu0 %214
    %v216 = vsel %vm194, %v191, 0.0
    %217 = vadd.xlane.f32.xlu0 %v216
    %v218 = vpop.xlane.xlu0 %217
    %v219 = vrcp.pop 32.0
    %v220 = vmul.f32 %v197, %v219
    %v221 = vmul.f32 %v200, %v219
    %v222 = vmul.f32 %v203, %v219
    %v223 = vmul.f32 %v206, %v219
    %v224 = vmul.f32 %v209, %v219
    %v225 = vmul.f32 %v212, %v219
    %v226 = vmul.f32 %v215, %v219
    %v227 = vmul.f32 %v218, %v219
    %v228 = vsub.f32 %v164, %v220
    %v229 = vsub.f32 %v167, %v221
    %v230 = vsub.f32 %v172, %v222
    %v231 = vsub.f32 %v175, %v223
    %v232 = vsub.f32 %v180, %v224
    %v233 = vsub.f32 %v183, %v225
    %v234 = vsub.f32 %v188, %v226
    %v235 = vsub.f32 %v191, %v227
    %v236 = vmul.f32 %v228, %v228
    %v237 = vmul.f32 %v229, %v229
    %v238 = vmul.f32 %v230, %v230
    %v239 = vmul.f32 %v231, %v231
    %v240 = vmul.f32 %v232, %v232
    %v241 = vmul.f32 %v233, %v233
    %v242 = vmul.f32 %v234, %v234
    %v243 = vmul.f32 %v235, %v235
    %v244 = vsel %vm194, %v236, 0.0
    %245 = vadd.xlane.f32.xlu0 %v244
    %v246 = vpop.xlane.xlu0 %245
    %v247 = vsel %vm194, %v237, 0.0
    %248 = vadd.xlane.f32.xlu0 %v247
    %v249 = vpop.xlane.xlu0 %248
    %v250 = vsel %vm194, %v238, 0.0
    %251 = vadd.xlane.f32.xlu0 %v250
    %v252 = vpop.xlane.xlu0 %251
    %v253 = vsel %vm194, %v239, 0.0
    %254 = vadd.xlane.f32.xlu0 %v253
    %v255 = vpop.xlane.xlu0 %254
    %v256 = vsel %vm194, %v240, 0.0
    %257 = vadd.xlane.f32.xlu0 %v256
    %v258 = vpop.xlane.xlu0 %257
    %v259 = vsel %vm194, %v241, 0.0
    %260 = vadd.xlane.f32.xlu0 %v259
    %v261 = vpop.xlane.xlu0 %260
    %v262 = vsel %vm194, %v242, 0.0
    %263 = vadd.xlane.f32.xlu0 %v262
    %v264 = vpop.xlane.xlu0 %263
    %v265 = vsel %vm194, %v243, 0.0
    %266 = vadd.xlane.f32.xlu0 %v265
    %v267 = vpop.xlane.xlu0 %266
    %v268 = vmul.f32 %v246, %v219
    %v269 = vmul.f32 %v249, %v219
    %v270 = vmul.f32 %v252, %v219
    %v271 = vmul.f32 %v255, %v219
    %v272 = vmul.f32 %v258, %v219
    %v273 = vmul.f32 %v261, %v219
    %v274 = vmul.f32 %v264, %v219
    %v275 = vmul.f32 %v267, %v219
    %v276 = vadd.f32 %v268, 1e-05
    %v277 = vadd.f32 %v269, 1e-05
    %v278 = vadd.f32 %v270, 1e-05
    %v279 = vadd.f32 %v271, 1e-05
    %v280 = vadd.f32 %v272, 1e-05
    %v281 = vadd.f32 %v273, 1e-05
    %v282 = vadd.f32 %v274, 1e-05
    %v283 = vadd.f32 %v275, 1e-05
    %v284 = vrsqrt.pop %v276
    %v285 = vrsqrt.pop %v277
    %v286 = vrsqrt.pop %v278
    %v287 = vrsqrt.pop %v279
    %v288 = vrsqrt.pop %v280
    %v289 = vrsqrt.pop %v281
    %v290 = vrsqrt.pop %v282
    %v291 = vrsqrt.pop %v283
    %v292 = vmul.f32 %v228, %v284
    %v293 = vmul.f32 %v229, %v285
    %v294 = vmul.f32 %v230, %v286
    %v295 = vmul.f32 %v231, %v287
    %v296 = vmul.f32 %v232, %v288
    %v297 = vmul.f32 %v233, %v289
    %v298 = vmul.f32 %v234, %v290
    %v299 = vmul.f32 %v235, %v291
    %v300 = vld [vmem:[%s3] sm:$0x1]
    %v302 = vlaneseq
    %v303 = vshrl.u32 %v302, 7
    %v304 = vsub.s32 0, %v303
    %v305 = vrot.slane %v300, %v304
    %v307 = vmul.f32 %v292, %v305
    %v308 = vmul.f32 %v293, %v305
    %v309 = vmul.f32 %v294, %v305
    %v310 = vmul.f32 %v295, %v305
    %v311 = vmul.f32 %v296, %v305
    %v312 = vmul.f32 %v297, %v305
    %v313 = vmul.f32 %v298, %v305
    %v314 = vmul.f32 %v299, %v305
    %v315 = vld [vmem:[%s4] sm:$0x1]
    %v317 = vlaneseq
    %v318 = vshrl.u32 %v317, 7
    %v319 = vsub.s32 0, %v318
    %v320 = vrot.slane %v315, %v319
    %v322 = vadd.f32 %v307, %v320
    %v323 = vadd.f32 %v308, %v320
    %v324 = vadd.f32 %v309, %v320
    %v325 = vadd.f32 %v310, %v320
    %v326 = vadd.f32 %v311, %v320
    %v327 = vadd.f32 %v312, %v320
    %v328 = vadd.f32 %v313, %v320
    %v329 = vadd.f32 %v314, %v320
    %v330 = vmax.f32 %v322, 0.0
    %v331 = vmax.f32 %v323, 0.0
    %v332 = vmax.f32 %v324, 0.0
    %v333 = vmax.f32 %v325, 0.0
    %v334 = vmax.f32 %v326, 0.0
    %v335 = vmax.f32 %v327, 0.0
    %v336 = vmax.f32 %v328, 0.0
    %v337 = vmax.f32 %v329, 0.0
    %338 = vst.msk [vmem:[#allocation2] sm:$0xff] %vm194, %v330
    %339 = vst.msk [vmem:[#allocation2 + $0x8] sm:$0xff] %vm194, %v331
    %340 = vst.msk [vmem:[#allocation2 + $0x10] sm:$0xff] %vm194, %v332
    %341 = vst.msk [vmem:[#allocation2 + $0x18] sm:$0xff] %vm194, %v333
    %342 = vst.msk [vmem:[#allocation2 + $0x20] sm:$0xff] %vm194, %v334
    %343 = vst.msk [vmem:[#allocation2 + $0x28] sm:$0xff] %vm194, %v335
    %344 = vst.msk [vmem:[#allocation2 + $0x30] sm:$0xff] %vm194, %v336
    %345 = vst.msk [vmem:[#allocation2 + $0x38] sm:$0xff] %vm194, %v337
    // Predicated region
    $region22: #{blstm_forward.4} parent=1 // pred_check
      _
    $region23: #{blstm_forward.4} parent=1 // pred_check_branch
      %347 = sbr.rel (0) target = $region25
    $region24: #{blstm_forward.4} parent=1 // pred_region
      %s349 = ssub.s32 1024, 1024
      %350 = vsyncadd [#allocation3], %s349
      %s351 = sshll.u32 [#allocation2], 4
      %s352 = int_to_ptr.vmem [resolvable:$true] %s351
      %357 = dma.vmem_to_hbm [thread:$0]  %s352, 1024, %s5, [#allocation3], 128, 128, 8
    $region25: #{blstm_forward.4} parent=1 // pred_fallthru
      _
    // Predicated region
    $region26: #{blstm_forward.4} parent=1 // pred_check
      _
    $region27: #{blstm_forward.4} parent=1 // pred_check_branch
      %359 = sbr.rel (0) target = $region29
    $region28: #{blstm_forward.4} parent=1 // pred_region
      %360 = dma.done [#allocation3], 1024
    $region29: #{blstm_forward.4} parent=1 // pred_fallthru
      _
    %361 = vsyncpa [#allocation3], 1

// kernel: blstm_forward.5
$region0: #{blstm_forward.5}
  #allocation0 [shape = 'u32[]', space=smem, size = 0x4, offset = 0x4, fixed_abs, tag = 'smem constant byte address 0x4 - core index']
  #allocation1 [shape = 'u32[144,128]{1,0:T(1,128)}', space=vmem, size = 0x12000, scoped, tag = 'internal scratch']
  #allocation2 [shape = 'f32[8,8,128]{2,1,0:T(8,128)}', space=vmem, size = 0x8000, scoped, tag = 'scratch operand']
  %s0 = inlined_call_operand.hbm [shape: f32[8,8,32], index: 0, kind: input, shape index: {}]
  %s1 = inlined_call_operand.hbm [shape: bf16[32,128], index: 1, kind: input, shape index: {}]
  %s2 = inlined_call_operand.hbm [shape: bf16[16,64], index: 2, kind: input, shape index: {}]
  %s3 = inlined_call_operand.hbm [shape: bf16[16,64], index: 3, kind: input, shape index: {}]
  %s4 = inlined_call_operand.hbm [shape: f32[1,128], index: 4, kind: input, shape index: {}]
  %s5 = inlined_call_operand.hbm [shape: f32[1,32], index: 5, kind: input, shape index: {}]
  %s6 = inlined_call_operand.hbm [shape: f32[1,32], index: 6, kind: input, shape index: {}]
  %s7 = inlined_call_operand.hbm [shape: f32[8,8,32], index: 7, kind: output, shape index: {}]
  %s8 = sld [smem:[#allocation0]]
  $region73: #{blstm_forward.5} parent=0
    _
  %s10 = ssub.s32 1, %s8
  %s11 = scalar_select 0, %s10, %s8
  $region1: #{blstm_forward.5} parent=0
    #allocation3 [shape = 'u8[32768]{0}', space=vmem, size = 0x8000, scoped, tag = 'input window, operand 0, single buffered']
    #allocation4 [shape = 's32[1]{0}', space=sflag, size = 0x4, scoped, tag = 'scoped memory for blstm_forward.5']
    #allocation5 [shape = 's32[1]{0}', space=sflag, size = 0x4, scoped, tag = 'scoped memory for blstm_forward.5']
    #allocation6 [shape = 'u8[8192]{0}', space=vmem, size = 0x2000, scoped, tag = 'input window, operand 1, single buffered']
    #allocation7 [shape = 's32[1]{0}', space=sflag, size = 0x4, scoped, tag = 'scoped memory for blstm_forward.5']
    #allocation8 [shape = 'u8[4096]{0}', space=vmem, size = 0x1000, scoped, tag = 'input window, operand 2, single buffered']
    #allocation9 [shape = 'u8[4096]{0}', space=vmem, size = 0x1000, scoped, tag = 'input window, operand 3, single buffered']
    #allocation10 [shape = 's32[1]{0}', space=sflag, size = 0x4, scoped, tag = 'scoped memory for blstm_forward.5']
    #allocation11 [shape = 'u8[512]{0}', space=vmem, size = 0x400, scoped, tag = 'input window, operand 4, single buffered']
    #allocation12 [shape = 'u8[512]{0}', space=vmem, size = 0x400, scoped, tag = 'input window, operand 5, single buffered']
    #allocation13 [shape = 's32[1]{0}', space=sflag, size = 0x4, scoped, tag = 'scoped memory for blstm_forward.5']
    #allocation14 [shape = 'u8[512]{0}', space=vmem, size = 0x400, scoped, tag = 'input window, operand 6, single buffered']
    #allocation15 [shape = 'u8[32768]{0}', space=vmem, size = 0x8000, scoped, tag = 'output window, operand 0, single buffered']
    %12 = vsyncpa [#allocation4], 0
    %13 = vsyncpa [#allocation7], 0
    %14 = vsyncpa [#allocation10], 0
    %15 = vsyncpa [#allocation13], 0
    %16 = vsyncpa [#allocation5], 0
    // Predicated region
    $region2: #{blstm_forward.5} parent=1 // pred_check
      _
    $region3: #{blstm_forward.5} parent=1 // pred_check_branch
      %18 = sbr.rel (0) target = $region5
    $region4: #{blstm_forward.5} parent=1 // pred_region
      %s20 = ssub.s32 1024, 1024
      %21 = vsyncadd [#allocation4], %s20
      %s22 = sshll.u32 [#allocation3], 4
      %s23 = int_to_ptr.vmem [resolvable:$true] %s22
      %28 = dma.hbm_to_vmem [thread:$0]  %s0, 1024, %s23, [#allocation4], 128, 128, 8
    $region5: #{blstm_forward.5} parent=1 // pred_fallthru
      _
    // Predicated region
    $region6: #{blstm_forward.5} parent=1 // pred_check
      _
    $region7: #{blstm_forward.5} parent=1 // pred_check_branch
      %30 = sbr.rel (0) target = $region9
    $region8: #{blstm_forward.5} parent=1 // pred_region
      %s32 = ssub.s32 256, 256
      %33 = vsyncadd [#allocation7], %s32
      %s34 = sshll.u32 [#allocation6], 4
      %s35 = int_to_ptr.vmem [resolvable:$true] %s34
      %40 = dma.hbm_to_vmem [thread:$0]  %s1, 256, %s35, [#allocation7], 64, 64, 4
    $region9: #{blstm_forward.5} parent=1 // pred_fallthru
      _
    // Predicated region
    $region10: #{blstm_forward.5} parent=1 // pred_check
      _
    $region11: #{blstm_forward.5} parent=1 // pred_check_branch
      %42 = sbr.rel (0) target = $region13
    $region12: #{blstm_forward.5} parent=1 // pred_region
      %s44 = ssub.s32 128, 128
      %45 = vsyncadd [#allocation7], %s44
      %s46 = sshll.u32 [#allocation8], 4
      %s47 = int_to_ptr.vmem [resolvable:$true] %s46
      %52 = dma.hbm_to_vmem [thread:$0]  %s2, 128, %s47, [#allocation7], 64, 64, 4
    $region13: #{blstm_forward.5} parent=1 // pred_fallthru
      _
    // Predicated region
    $region14: #{blstm_forward.5} parent=1 // pred_check
      _
    $region15: #{blstm_forward.5} parent=1 // pred_check_branch
      %54 = sbr.rel (0) target = $region17
    $region16: #{blstm_forward.5} parent=1 // pred_region
      %s56 = ssub.s32 128, 128
      %57 = vsyncadd [#allocation10], %s56
      %s58 = sshll.u32 [#allocation9], 4
      %s59 = int_to_ptr.vmem [resolvable:$true] %s58
      %64 = dma.hbm_to_vmem [thread:$0]  %s3, 128, %s59, [#allocation10], 64, 64, 4
    $region17: #{blstm_forward.5} parent=1 // pred_fallthru
      _
    // Predicated region
    $region18: #{blstm_forward.5} parent=1 // pred_check
      _
    $region19: #{blstm_forward.5} parent=1 // pred_check_branch
      %66 = sbr.rel (0) target = $region21
    $region20: #{blstm_forward.5} parent=1 // pred_region
      %s68 = ssub.s32 16, 16
      %69 = vsyncadd [#allocation10], %s68
      %s71 = sshll.u32 [#allocation11], 4
      %s72 = int_to_ptr.vmem [resolvable:$true] %s71
      %74 = dma.hbm_to_vmem [thread:$0]  %s4, 16, %s72, [#allocation10]
    $region21: #{blstm_forward.5} parent=1 // pred_fallthru
      _
    // Predicated region
    $region22: #{blstm_forward.5} parent=1 // pred_check
      _
    $region23: #{blstm_forward.5} parent=1 // pred_check_branch
      %76 = sbr.rel (0) target = $region25
    $region24: #{blstm_forward.5} parent=1 // pred_region
      %s78 = ssub.s32 16, 16
      %79 = vsyncadd [#allocation13], %s78
      %s81 = sshll.u32 [#allocation12], 4
      %s82 = int_to_ptr.vmem [resolvable:$true] %s81
      %84 = dma.hbm_to_vmem [thread:$0]  %s5, 16, %s82, [#allocation13]
    $region25: #{blstm_forward.5} parent=1 // pred_fallthru
      _
    // Predicated region
    $region26: #{blstm_forward.5} parent=1 // pred_check
      _
    $region27: #{blstm_forward.5} parent=1 // pred_check_branch
      %86 = sbr.rel (0) target = $region29
    $region28: #{blstm_forward.5} parent=1 // pred_region
      %s88 = ssub.s32 16, 16
      %89 = vsyncadd [#allocation13], %s88
      %s91 = sshll.u32 [#allocation14], 4
      %s92 = int_to_ptr.vmem [resolvable:$true] %s91
      %94 = dma.hbm_to_vmem [thread:$0]  %s6, 16, %s92, [#allocation13]
    $region29: #{blstm_forward.5} parent=1 // pred_fallthru
      _
    // Predicated region
    $region30: #{blstm_forward.5} parent=1 // pred_check
      _
    $region31: #{blstm_forward.5} parent=1 // pred_check_branch
      %96 = sbr.rel (0) target = $region33
    $region32: #{blstm_forward.5} parent=1 // pred_region
      %97 = dma.done [#allocation4], 1024
    $region33: #{blstm_forward.5} parent=1 // pred_fallthru
      _
    // Predicated region
    $region34: #{blstm_forward.5} parent=1 // pred_check
      _
    $region35: #{blstm_forward.5} parent=1 // pred_check_branch
      %99 = sbr.rel (0) target = $region37
    $region36: #{blstm_forward.5} parent=1 // pred_region
      %100 = dma.done [#allocation7], 256
    $region37: #{blstm_forward.5} parent=1 // pred_fallthru
      _
    // Predicated region
    $region38: #{blstm_forward.5} parent=1 // pred_check
      _
    $region39: #{blstm_forward.5} parent=1 // pred_check_branch
      %102 = sbr.rel (0) target = $region41
    $region40: #{blstm_forward.5} parent=1 // pred_region
      %103 = dma.done [#allocation7], 128
    $region41: #{blstm_forward.5} parent=1 // pred_fallthru
      _
    // Predicated region
    $region42: #{blstm_forward.5} parent=1 // pred_check
      _
    $region43: #{blstm_forward.5} parent=1 // pred_check_branch
      %105 = sbr.rel (0) target = $region45
    $region44: #{blstm_forward.5} parent=1 // pred_region
      %106 = dma.done [#allocation10], 128
    $region45: #{blstm_forward.5} parent=1 // pred_fallthru
      _
    // Predicated region
    $region46: #{blstm_forward.5} parent=1 // pred_check
      _
    $region47: #{blstm_forward.5} parent=1 // pred_check_branch
      %108 = sbr.rel (0) target = $region49
    $region48: #{blstm_forward.5} parent=1 // pred_region
      %109 = dma.done [#allocation10], 16
    $region49: #{blstm_forward.5} parent=1 // pred_fallthru
      _
    // Predicated region
    $region50: #{blstm_forward.5} parent=1 // pred_check
      _
    $region51: #{blstm_forward.5} parent=1 // pred_check_branch
      %111 = sbr.rel (0) target = $region53
    $region52: #{blstm_forward.5} parent=1 // pred_region
      %112 = dma.done [#allocation13], 16
    $region53: #{blstm_forward.5} parent=1 // pred_fallthru
      _
    // Predicated region
    $region54: #{blstm_forward.5} parent=1 // pred_check
      _
    $region55: #{blstm_forward.5} parent=1 // pred_check_branch
      %114 = sbr.rel (0) target = $region57
    $region56: #{blstm_forward.5} parent=1 // pred_region
      %115 = dma.done [#allocation13], 16
    $region57: #{blstm_forward.5} parent=1 // pred_fallthru
      _
    %v117 = vld [vmem:[#allocation3] sm:$0xff]
    %v118 = vld [vmem:[#allocation3 + $0x8] sm:$0xff]
    %v119 = vld [vmem:[#allocation3 + $0x10] sm:$0xff]
    %v120 = vld [vmem:[#allocation3 + $0x18] sm:$0xff]
    %v121 = vld [vmem:[#allocation3 + $0x20] sm:$0xff]
    %v122 = vld [vmem:[#allocation3 + $0x28] sm:$0xff]
    %v123 = vld [vmem:[#allocation3 + $0x30] sm:$0xff]
    %v124 = vld [vmem:[#allocation3 + $0x38] sm:$0xff]
    %v125 = vpack.c.bf16 %v118, %v117
    %v126 = vpack.c.bf16 %v120, %v119
    %v127 = vpack.c.bf16 %v122, %v121
    %v128 = vpack.c.bf16 %v124, %v123
    %v129 = vld [vmem:[#allocation6] sm:$0xf]
    %v130 = vld [vmem:[#allocation6 + $0x4] sm:$0xf]
    %v131 = vld [vmem:[#allocation6 + $0x8] sm:$0xf]
    %v132 = vld [vmem:[#allocation6 + $0xc] sm:$0xf]
    %v133 = vld [vmem:[#allocation11] sm:$0x1]
    %v135 = vlaneseq
    %v136 = vshrl.u32 %v135, 7
    %v137 = vsub.s32 0, %v136
    %v138 = vrot.slane %v133, %v137
    %v144 = vunpack.c.l.b16 %v129
    %v145 = vunpack.c.l.b16 %v130
    %v146 = vunpack.c.l.b16 %v131
    %v147 = vunpack.c.l.b16 %v132
    %v148 = vpack.c.b16 %v145, %v144
    %v149 = vpack.c.b16 %v147, %v146
    %vm152 = vcmask 261120
    %v154 = vsel %vm152, %v125, 0
    %v157 = vsel %vm152, %v126, 0
    %v160 = vsel %vm152, %v127, 0
    %v163 = vsel %vm152, %v128, 0
    %165 = vmatprep.subr.bf16.mxu0 0
    %166 = vmatpush1.bf16.msra.mxu0 %v148
    %167 = vmatprep.subr.bf16.mxu0 0
    %168 = vmatpush1.bf16.msra.mxu0 %v149
    %169 = vmatprep.subr.bf16.mxu0 0
    %170 = vmatpush1.bf16.msra.mxu0 0
    %171 = vmatprep.subr.bf16.mxu0 0
    %172 = vmatpush1.bf16.msra.mxu0 0
    %173 = vmatprep.subr.bf16.mxu0 0
    %174 = vmatpush1.bf16.msra.mxu0 0
    %175 = vmatprep.subr.bf16.mxu0 0
    %176 = vmatpush1.bf16.msra.mxu0 0
    %177 = vmatprep.subr.bf16.mxu0 0
    %178 = vmatpush1.bf16.msra.mxu0 0
    %179 = vmatprep.subr.bf16.mxu0 0
    %180 = vmatpush1.bf16.msra.mxu0 0
    %181 = vmatprep.subr.bf16.mxu0 0
    %182 = vmatpush1.bf16.msra.mxu0 0
    %183 = vmatprep.subr.bf16.mxu0 0
    %184 = vmatpush1.bf16.msra.mxu0 0
    %185 = vmatprep.subr.bf16.mxu0 0
    %186 = vmatpush1.bf16.msra.mxu0 0
    %187 = vmatprep.subr.bf16.mxu0 0
    %188 = vmatpush1.bf16.msra.mxu0 0
    %189 = vmatprep.subr.bf16.mxu0 0
    %190 = vmatpush1.bf16.msra.mxu0 0
    %191 = vmatprep.subr.bf16.mxu0 0
    %192 = vmatpush1.bf16.msra.mxu0 0
    %193 = vmatprep.subr.bf16.mxu0 0
    %194 = vmatpush1.bf16.msra.mxu0 0
    %195 = vmatprep.subr.bf16.mxu0 0
    %196 = vmatpush1.bf16.msra.mxu0 0
    %197 = vmatprep.mubr.bf16.mxu0 0
    %198 = vmatmul.mubr.bf16.gmra.mrb[0].mxu0 %v154
    %v199 = vpop.f32.mrb[0].mxu0
    %v200 = vadd.f32 %v138, %v199
    %v201 = vpop.f32.mrb[0].mxu0
    %v202 = vpop.f32.mrb[0].mxu0
    %v203 = vadd.f32 %v138, %v202
    %v204 = vpop.f32.mrb[0].mxu0
    %205 = vmatprep.mubr.bf16.mxu0 0
    %206 = vmatmul.mubr.bf16.gmra.mrb[0].mxu0 %v157
    %v207 = vpop.f32.mrb[0].mxu0
    %v208 = vadd.f32 %v138, %v207
    %v209 = vpop.f32.mrb[0].mxu0
    %v210 = vpop.f32.mrb[0].mxu0
    %v211 = vadd.f32 %v138, %v210
    %v212 = vpop.f32.mrb[0].mxu0
    %213 = vmatprep.mubr.bf16.mxu0 0
    %214 = vmatmul.mubr.bf16.gmra.mrb[0].mxu0 %v160
    %v215 = vpop.f32.mrb[0].mxu0
    %v216 = vadd.f32 %v138, %v215
    %v217 = vpop.f32.mrb[0].mxu0
    %v218 = vpop.f32.mrb[0].mxu0
    %v219 = vadd.f32 %v138, %v218
    %v220 = vpop.f32.mrb[0].mxu0
    %221 = vmatprep.mubr.bf16.mxu0 0
    %222 = vmatmul.mubr.bf16.gmra.mrb[0].mxu0 %v163
    %v223 = vpop.f32.mrb[0].mxu0
    %v224 = vadd.f32 %v138, %v223
    %v225 = vpop.f32.mrb[0].mxu0
    %v226 = vpop.f32.mrb[0].mxu0
    %v227 = vadd.f32 %v138, %v226
    %v228 = vpop.f32.mrb[0].mxu0
    %229 = vdwg.mxu0
    %230 = vst [vmem:[#allocation2] sm:$0xff] %v200
    %231 = vst [vmem:[#allocation2 + $0x8] sm:$0xff] %v203
    %232 = vst [vmem:[#allocation2 + $0x10] sm:$0xff] %v208
    %233 = vst [vmem:[#allocation2 + $0x18] sm:$0xff] %v211
    %234 = vst [vmem:[#allocation2 + $0x20] sm:$0xff] %v216
    %235 = vst [vmem:[#allocation2 + $0x28] sm:$0xff] %v219
    %236 = vst [vmem:[#allocation2 + $0x30] sm:$0xff] %v224
    %237 = vst [vmem:[#allocation2 + $0x38] sm:$0xff] %v227
    %v238 = vld [vmem:[#allocation8] sm:$0xf]
    %v239 = vld [vmem:[#allocation8 + $0x4] sm:$0xf]
    %v240 = vld [vmem:[#allocation9] sm:$0xf]
    %v241 = vld [vmem:[#allocation9 + $0x4] sm:$0xf]
    loop: start=0, step=1, limit=8
    $region58: #{blstm_forward.5} parent=1 // loop_pre_header
      _
    $region59: #{blstm_forward.5} parent=1 // loop_header
      %s243 = sphi 0, %s247
      %p244 = scmp.ge.s32.totalorder %s243, 8
      %v248 = vphi 0.0, %v395
      %v249 = vphi 0.0, %v389
      %v250 = vphi 0.0, %v419
      %v251 = vphi 0.0, %v413
    $region60: #{blstm_forward.5} parent=1 // loop_header_branch
      %246 = sbr.rel (%p244) target = $region64
    $region61: #{blstm_forward.5} parent=1 // loop_body
      %s252 = ssub.s32 7, %s243
      %v253 = vpack.c.bf16 %v248, %v248
      %255 = vrot.lane.b32.xlu0 %v253, 80
      %v256 = vpop.permute.xlu0 %255
      %v259 = vunpack.c.l.b16 %v238
      %v260 = vunpack.c.l.b16 %v239
      %v261 = vpack.c.b16 %v260, %v259
      %vm263 = vcmask 130048
      %v265 = vsel %vm263, %v256, 0
      %267 = vmatprep.subr.bf16.mxu0 0
      %268 = vmatpush1.bf16.msra.mxu0 %v261
      %269 = vmatprep.subr.bf16.mxu0 0
      %270 = vmatpush1.bf16.msra.mxu0 0
      %271 = vmatprep.subr.bf16.mxu0 0
      %272 = vmatpush1.bf16.msra.mxu0 0
      %273 = vmatprep.subr.bf16.mxu0 0
      %274 = vmatpush1.bf16.msra.mxu0 0
      %275 = vmatprep.subr.bf16.mxu0 0
      %276 = vmatpush1.bf16.msra.mxu0 0
      %277 = vmatprep.subr.bf16.mxu0 0
      %278 = vmatpush1.bf16.msra.mxu0 0
      %279 = vmatprep.subr.bf16.mxu0 0
      %280 = vmatpush1.bf16.msra.mxu0 0
      %281 = vmatprep.subr.bf16.mxu0 0
      %282 = vmatpush1.bf16.msra.mxu0 0
      %283 = vmatprep.subr.bf16.mxu0 0
      %284 = vmatpush1.bf16.msra.mxu0 0
      %285 = vmatprep.subr.bf16.mxu0 0
      %286 = vmatpush1.bf16.msra.mxu0 0
      %287 = vmatprep.subr.bf16.mxu0 0
      %288 = vmatpush1.bf16.msra.mxu0 0
      %289 = vmatprep.subr.bf16.mxu0 0
      %290 = vmatpush1.bf16.msra.mxu0 0
      %291 = vmatprep.subr.bf16.mxu0 0
      %292 = vmatpush1.bf16.msra.mxu0 0
      %293 = vmatprep.subr.bf16.mxu0 0
      %294 = vmatpush1.bf16.msra.mxu0 0
      %295 = vmatprep.subr.bf16.mxu0 0
      %296 = vmatpush1.bf16.msra.mxu0 0
      %297 = vmatprep.subr.bf16.mxu0 0
      %298 = vmatpush1.bf16.msra.mxu0 0
      %299 = vmatprep.mubr.bf16.mxu0 0
      %300 = vmatmul.mubr.bf16.gmra.mrb[0].mxu0 %v265
      %v301 = vpop.f32.mrb[0].mxu0
      %v302 = vadd.f32 0.0, %v301
      %v303 = vpop.f32.mrb[0].mxu0
      %v304 = vpop.f32.mrb[0].mxu0
      %v305 = vpop.f32.mrb[0].mxu0
      %306 = vdwg.mxu0
      %v307 = vpack.c.bf16 %v250, %v250
      %309 = vrot.lane.b32.xlu0 %v307, 16
      %v310 = vpop.permute.xlu0 %309
      %v313 = vunpack.c.l.b16 %v240
      %v314 = vunpack.c.l.b16 %v241
      %v315 = vpack.c.b16 %v314, %v313
      %v318 = vsel %vm263, %v310, 0
      %320 = vmatprep.subr.bf16.mxu0 0
      %321 = vmatpush1.bf16.msra.mxu0 %v315
      %322 = vmatprep.subr.bf16.mxu0 0
      %323 = vmatpush1.bf16.msra.mxu0 0
      %324 = vmatprep.subr.bf16.mxu0 0
      %325 = vmatpush1.bf16.msra.mxu0 0
      %326 = vmatprep.subr.bf16.mxu0 0
      %327 = vmatpush1.bf16.msra.mxu0 0
      %328 = vmatprep.subr.bf16.mxu0 0
      %329 = vmatpush1.bf16.msra.mxu0 0
      %330 = vmatprep.subr.bf16.mxu0 0
      %331 = vmatpush1.bf16.msra.mxu0 0
      %332 = vmatprep.subr.bf16.mxu0 0
      %333 = vmatpush1.bf16.msra.mxu0 0
      %334 = vmatprep.subr.bf16.mxu0 0
      %335 = vmatpush1.bf16.msra.mxu0 0
      %336 = vmatprep.subr.bf16.mxu0 0
      %337 = vmatpush1.bf16.msra.mxu0 0
      %338 = vmatprep.subr.bf16.mxu0 0
      %339 = vmatpush1.bf16.msra.mxu0 0
      %340 = vmatprep.subr.bf16.mxu0 0
      %341 = vmatpush1.bf16.msra.mxu0 0
      %342 = vmatprep.subr.bf16.mxu0 0
      %343 = vmatpush1.bf16.msra.mxu0 0
      %344 = vmatprep.subr.bf16.mxu0 0
      %345 = vmatpush1.bf16.msra.mxu0 0
      %346 = vmatprep.subr.bf16.mxu0 0
      %347 = vmatpush1.bf16.msra.mxu0 0
      %348 = vmatprep.subr.bf16.mxu0 0
      %349 = vmatpush1.bf16.msra.mxu0 0
      %350 = vmatprep.subr.bf16.mxu0 0
      %351 = vmatpush1.bf16.msra.mxu0 0
      %352 = vmatprep.mubr.bf16.mxu0 0
      %353 = vmatmul.mubr.bf16.gmra.mrb[0].mxu0 %v318
      %v354 = vpop.f32.mrb[0].mxu0
      %v355 = vadd.f32 0.0, %v354
      %v356 = vpop.f32.mrb[0].mxu0
      %v357 = vpop.f32.mrb[0].mxu0
      %v358 = vpop.f32.mrb[0].mxu0
      %359 = vdwg.mxu0
      %s360 = smul.u32 %s243, 8
      %s361 = scalar_lea.vmem [#allocation2], %s360
      %v362 = vld [vmem:[%s361] sm:$0xff]
      %v363 = vadd.f32 %v362, %v302
      %s364 = smul.u32 %s252, 8
      %s365 = scalar_lea.vmem [#allocation2], %s364
      %v366 = vld [vmem:[%s365] sm:$0xff]
      %368 = vrot.lane.b32.xlu0 %v355, 64
      %v369 = vpop.permute.xlu0 %368
      %v371 = vadd.f32 %v366, %v369
      %v372 = vxor.u32 %v363, 2147483648
      %v373 = vmul.f32 %v372, 1.442695
      %v374 = vpow.pop %v373
      %v375 = vadd.f32 %v374, 1.0
      %v376 = vrcp.pop %v375
      %v377 = vmul.f32 1.0, %v376
      %v378 = vtanh.pop %v363
      %v379 = vmul.f32 %v377, %v249
      %381 = vrot.lane.b32.xlu0 %v378, 96
      %v382 = vpop.permute.xlu0 %381
      %v384 = vmul.f32 %v377, %v382
      %386 = vrot.lane.b32.xlu0 %v384, 16
      %v387 = vpop.permute.xlu0 %386
      %v389 = vadd.f32 %v379, %v387
      %v390 = vtanh.pop %v389
      %392 = vrot.lane.b32.xlu0 %v390, 32
      %v393 = vpop.permute.xlu0 %392
      %v395 = vmul.f32 %v377, %v393
      %v396 = vxor.u32 %v371, 2147483648
      %v397 = vmul.f32 %v396, 1.442695
      %v398 = vpow.pop %v397
      %v399 = vadd.f32 %v398, 1.0
      %v400 = vrcp.pop %v399
      %v401 = vmul.f32 1.0, %v400
      %v402 = vtanh.pop %v371
      %v403 = vmul.f32 %v401, %v251
      %405 = vrot.lane.b32.xlu0 %v402, 96
      %v406 = vpop.permute.xlu0 %405
      %v408 = vmul.f32 %v401, %v406
      %410 = vrot.lane.b32.xlu0 %v408, 16
      %v411 = vpop.permute.xlu0 %410
      %v413 = vadd.f32 %v403, %v411
      %v414 = vtanh.pop %v413
      %416 = vrot.lane.b32.xlu0 %v414, 32
      %v417 = vpop.permute.xlu0 %416
      %v419 = vmul.f32 %v401, %v417
      %421 = vrot.lane.b32.xlu0 %v395, 80
      %v422 = vpop.permute.xlu0 %421
      %s424 = scalar_lea.vmem [#allocation15], %s360
      %425 = vst.msk [vmem:[%s424] sm:$0xff] %vm263, %v422
      %427 = vrot.lane.b32.xlu0 %v419, 32
      %v428 = vpop.permute.xlu0 %427
      %s430 = scalar_lea.vmem [#allocation15], %s364
      %vm431 = vcmask 261248
      %432 = vst.msk [vmem:[%s430] sm:$0xff] %vm431, %v428
    $region62: #{blstm_forward.5} parent=1 // loop_footer
      %s247 = sadd.s32 1, %s243
    $region63: #{blstm_forward.5} parent=1 // loop_footer_branch
      %242 = sbr.rel target = $region59
    $region64: #{blstm_forward.5} parent=1 // loop_exit
      _
    %v433 = vld [vmem:[#allocation15] sm:$0xff]
    %v434 = vld [vmem:[#allocation15 + $0x8] sm:$0xff]
    %v435 = vld [vmem:[#allocation15 + $0x10] sm:$0xff]
    %v436 = vld [vmem:[#allocation15 + $0x18] sm:$0xff]
    %v437 = vld [vmem:[#allocation15 + $0x20] sm:$0xff]
    %v438 = vld [vmem:[#allocation15 + $0x28] sm:$0xff]
    %v439 = vld [vmem:[#allocation15 + $0x30] sm:$0xff]
    %v440 = vld [vmem:[#allocation15 + $0x38] sm:$0xff]
    %v441 = vsel %vm152, %v433, 0.0
    %442 = vadd.xlane.f32.xlu0 %v441
    %v443 = vpop.xlane.xlu0 %442
    %v444 = vsel %vm152, %v434, 0.0
    %445 = vadd.xlane.f32.xlu0 %v444
    %v446 = vpop.xlane.xlu0 %445
    %v447 = vsel %vm152, %v435, 0.0
    %448 = vadd.xlane.f32.xlu0 %v447
    %v449 = vpop.xlane.xlu0 %448
    %v450 = vsel %vm152, %v436, 0.0
    %451 = vadd.xlane.f32.xlu0 %v450
    %v452 = vpop.xlane.xlu0 %451
    %v453 = vsel %vm152, %v437, 0.0
    %454 = vadd.xlane.f32.xlu0 %v453
    %v455 = vpop.xlane.xlu0 %454
    %v456 = vsel %vm152, %v438, 0.0
    %457 = vadd.xlane.f32.xlu0 %v456
    %v458 = vpop.xlane.xlu0 %457
    %v459 = vsel %vm152, %v439, 0.0
    %460 = vadd.xlane.f32.xlu0 %v459
    %v461 = vpop.xlane.xlu0 %460
    %v462 = vsel %vm152, %v440, 0.0
    %463 = vadd.xlane.f32.xlu0 %v462
    %v464 = vpop.xlane.xlu0 %463
    %v465 = vrcp.pop 32.0
    %v466 = vmul.f32 %v443, %v465
    %v467 = vmul.f32 %v446, %v465
    %v468 = vmul.f32 %v449, %v465
    %v469 = vmul.f32 %v452, %v465
    %v470 = vmul.f32 %v455, %v465
    %v471 = vmul.f32 %v458, %v465
    %v472 = vmul.f32 %v461, %v465
    %v473 = vmul.f32 %v464, %v465
    %v474 = vsub.f32 %v433, %v466
    %v475 = vsub.f32 %v434, %v467
    %v476 = vsub.f32 %v435, %v468
    %v477 = vsub.f32 %v436, %v469
    %v478 = vsub.f32 %v437, %v470
    %v479 = vsub.f32 %v438, %v471
    %v480 = vsub.f32 %v439, %v472
    %v481 = vsub.f32 %v440, %v473
    %v482 = vmul.f32 %v474, %v474
    %v483 = vmul.f32 %v475, %v475
    %v484 = vmul.f32 %v476, %v476
    %v485 = vmul.f32 %v477, %v477
    %v486 = vmul.f32 %v478, %v478
    %v487 = vmul.f32 %v479, %v479
    %v488 = vmul.f32 %v480, %v480
    %v489 = vmul.f32 %v481, %v481
    %v490 = vsel %vm152, %v482, 0.0
    %491 = vadd.xlane.f32.xlu0 %v490
    %v492 = vpop.xlane.xlu0 %491
    %v493 = vsel %vm152, %v483, 0.0
    %494 = vadd.xlane.f32.xlu0 %v493
    %v495 = vpop.xlane.xlu0 %494
    %v496 = vsel %vm152, %v484, 0.0
    %497 = vadd.xlane.f32.xlu0 %v496
    %v498 = vpop.xlane.xlu0 %497
    %v499 = vsel %vm152, %v485, 0.0
    %500 = vadd.xlane.f32.xlu0 %v499
    %v501 = vpop.xlane.xlu0 %500
    %v502 = vsel %vm152, %v486, 0.0
    %503 = vadd.xlane.f32.xlu0 %v502
    %v504 = vpop.xlane.xlu0 %503
    %v505 = vsel %vm152, %v487, 0.0
    %506 = vadd.xlane.f32.xlu0 %v505
    %v507 = vpop.xlane.xlu0 %506
    %v508 = vsel %vm152, %v488, 0.0
    %509 = vadd.xlane.f32.xlu0 %v508
    %v510 = vpop.xlane.xlu0 %509
    %v511 = vsel %vm152, %v489, 0.0
    %512 = vadd.xlane.f32.xlu0 %v511
    %v513 = vpop.xlane.xlu0 %512
    %v514 = vmul.f32 %v492, %v465
    %v515 = vmul.f32 %v495, %v465
    %v516 = vmul.f32 %v498, %v465
    %v517 = vmul.f32 %v501, %v465
    %v518 = vmul.f32 %v504, %v465
    %v519 = vmul.f32 %v507, %v465
    %v520 = vmul.f32 %v510, %v465
    %v521 = vmul.f32 %v513, %v465
    %v522 = vadd.f32 %v514, 1e-05
    %v523 = vadd.f32 %v515, 1e-05
    %v524 = vadd.f32 %v516, 1e-05
    %v525 = vadd.f32 %v517, 1e-05
    %v526 = vadd.f32 %v518, 1e-05
    %v527 = vadd.f32 %v519, 1e-05
    %v528 = vadd.f32 %v520, 1e-05
    %v529 = vadd.f32 %v521, 1e-05
    %v530 = vrsqrt.pop %v522
    %v531 = vrsqrt.pop %v523
    %v532 = vrsqrt.pop %v524
    %v533 = vrsqrt.pop %v525
    %v534 = vrsqrt.pop %v526
    %v535 = vrsqrt.pop %v527
    %v536 = vrsqrt.pop %v528
    %v537 = vrsqrt.pop %v529
    %v538 = vmul.f32 %v474, %v530
    %v539 = vmul.f32 %v475, %v531
    %v540 = vmul.f32 %v476, %v532
    %v541 = vmul.f32 %v477, %v533
    %v542 = vmul.f32 %v478, %v534
    %v543 = vmul.f32 %v479, %v535
    %v544 = vmul.f32 %v480, %v536
    %v545 = vmul.f32 %v481, %v537
    %v546 = vld [vmem:[#allocation12] sm:$0x1]
    %v548 = vlaneseq
    %v549 = vshrl.u32 %v548, 7
    %v550 = vsub.s32 0, %v549
    %v551 = vrot.slane %v546, %v550
    %v553 = vmul.f32 %v538, %v551
    %v554 = vmul.f32 %v539, %v551
    %v555 = vmul.f32 %v540, %v551
    %v556 = vmul.f32 %v541, %v551
    %v557 = vmul.f32 %v542, %v551
    %v558 = vmul.f32 %v543, %v551
    %v559 = vmul.f32 %v544, %v551
    %v560 = vmul.f32 %v545, %v551
    %v561 = vld [vmem:[#allocation14] sm:$0x1]
    %v563 = vlaneseq
    %v564 = vshrl.u32 %v563, 7
    %v565 = vsub.s32 0, %v564
    %v566 = vrot.slane %v561, %v565
    %v568 = vadd.f32 %v553, %v566
    %v569 = vadd.f32 %v554, %v566
    %v570 = vadd.f32 %v555, %v566
    %v571 = vadd.f32 %v556, %v566
    %v572 = vadd.f32 %v557, %v566
    %v573 = vadd.f32 %v558, %v566
    %v574 = vadd.f32 %v559, %v566
    %v575 = vadd.f32 %v560, %v566
    %576 = vst.msk [vmem:[#allocation15] sm:$0xff] %vm152, %v568
    %577 = vst.msk [vmem:[#allocation15 + $0x8] sm:$0xff] %vm152, %v569
    %578 = vst.msk [vmem:[#allocation15 + $0x10] sm:$0xff] %vm152, %v570
    %579 = vst.msk [vmem:[#allocation15 + $0x18] sm:$0xff] %vm152, %v571
    %580 = vst.msk [vmem:[#allocation15 + $0x20] sm:$0xff] %vm152, %v572
    %581 = vst.msk [vmem:[#allocation15 + $0x28] sm:$0xff] %vm152, %v573
    %582 = vst.msk [vmem:[#allocation15 + $0x30] sm:$0xff] %vm152, %v574
    %583 = vst.msk [vmem:[#allocation15 + $0x38] sm:$0xff] %vm152, %v575
    // Predicated region
    $region65: #{blstm_forward.5} parent=1 // pred_check
      _
    $region66: #{blstm_forward.5} parent=1 // pred_check_branch
      %585 = sbr.rel (0) target = $region68
    $region67: #{blstm_forward.5} parent=1 // pred_region
      %s587 = ssub.s32 1024, 1024
      %588 = vsyncadd [#allocation5], %s587
      %s589 = sshll.u32 [#allocation15], 4
      %s590 = int_to_ptr.vmem [resolvable:$true] %s589
      %595 = dma.vmem_to_hbm [thread:$0]  %s590, 1024, %s7, [#allocation5], 128, 128, 8
    $region68: #{blstm_forward.5} parent=1 // pred_fallthru
      _
    // Predicated region
    $region69: #{blstm_forward.5} parent=1 // pred_check
      _
    $region70: #{blstm_forward.5} parent=1 // pred_check_branch
      %597 = sbr.rel (0) target = $region72
    $region71: #{blstm_forward.5} parent=1 // pred_region
      %598 = dma.done [#allocation5], 1024
    $region72: #{blstm_forward.5} parent=1 // pred_fallthru
      _
    %599 = vsyncpa [#allocation4], 1
    %600 = vsyncpa [#allocation7], 1
    %601 = vsyncpa [#allocation10], 1
    %602 = vsyncpa [#allocation13], 1
    %603 = vsyncpa [#allocation5], 1

</llo_original>
